<compile_context>
chip_gen: v7x
topology: tpu7x:2x2x1
jax: 0.10.0
libtpu: 0.0.40
codegen_flags: <defaults>
</compile_context>

<pallas_src>
import functools

import jax
import jax.numpy as jnp
from jax.experimental import pallas as pl
from jax.experimental.pallas import tpu as pltpu

block_size = 33
n_embd = 64

_HIGHEST = jax.lax.Precision.HIGHEST


def head_kernel(x_ref, wqkv_ref, mask_ref, o_ref, *, head_size):
    # x_ref: (N, C), wqkv_ref: (C, 3H), mask_ref: (N, N), o_ref: (N, H)
    H = head_size
    x = x_ref[...].astype(jnp.float32)                      # (N, C)
    w = wqkv_ref[...].astype(jnp.float32)                   # (C, 3H)

    # Fused QKV projection: one MXU op instead of three.
    qkv = jnp.dot(x, w, preferred_element_type=jnp.float32,
                  precision=_HIGHEST)                        # (N, 3H)
    k = qkv[:, :H]
    q = qkv[:, H:2 * H]
    v = qkv[:, 2 * H:]

    scale = jnp.float32(H) ** -0.5
    # q @ k^T without materializing k.T (contract the H axis of both).
    wei = jax.lax.dot_general(
        q, k,
        dimension_numbers=(((1,), (1,)), ((), ())),
        preferred_element_type=jnp.float32,
        precision=_HIGHEST) * scale                          # (N, N)

    # Block-diagonal causal mask (precomputed in the wrapper). Every row keeps
    # its diagonal entry, so no row is ever fully masked.
    wei = jnp.where(mask_ref[...] != 0, wei, jnp.float32(-1e30))

    # Numerically stable softmax along the last axis (exact division).
    wei = wei - jnp.max(wei, axis=-1, keepdims=True)
    e = jnp.exp(wei)
    p = e / jnp.sum(e, axis=-1, keepdims=True)

    # Dropout(p=0.2) is identity in eval mode.
    out = jnp.dot(p, v, preferred_element_type=jnp.float32,
                  precision=_HIGHEST)                        # (N, H)
    o_ref[...] = out.astype(o_ref.dtype)


def head_forward(x, w_key, w_query, w_value):
    """x: (B, T, C); w_*: (C, H). Returns (B, T, H). Eval-mode forward."""
    B, T, C = x.shape
    H = w_key.shape[1]

    # Pad T up to a multiple of 8 so all sublane ops/stores are unmasked.
    T_pad = ((T + 7) // 8) * 8
    if T_pad != T:
        x = jnp.pad(x, ((0, 0), (0, T_pad - T), (0, 0)))
    N = B * T_pad

    x2d = x.reshape(N, C)
    w_qkv = jnp.concatenate([w_key, w_query, w_value], axis=1)   # (C, 3H)

    # Block-diagonal causal mask over the flattened (B*T_pad) axis, built once
    # outside the kernel (no per-step iota/compare work inside).
    t = jnp.arange(T_pad)
    causal = (t[None, :] <= t[:, None]).astype(jnp.float32)      # (T_pad, T_pad)
    mask = jnp.kron(jnp.eye(B, dtype=jnp.float32), causal)       # (N, N)

    kernel = functools.partial(head_kernel, head_size=H)

    out = pl.pallas_call(
        kernel,
        out_shape=jax.ShapeDtypeStruct((N, H), x.dtype),
        in_specs=[
            pl.BlockSpec(memory_space=pltpu.MemorySpace.VMEM),
            pl.BlockSpec(memory_space=pltpu.MemorySpace.VMEM),
            pl.BlockSpec(memory_space=pltpu.MemorySpace.VMEM),
        ],
        out_specs=pl.BlockSpec(memory_space=pltpu.MemorySpace.VMEM),
    )(x2d, w_qkv, mask)

    out = out.reshape(B, T_pad, H)
    if T_pad != T:
        out = out[:, :T, :]
    return out


def head_reference(x, w_key, w_query, w_value):
    """Pure-JAX reference mirroring the PyTorch forward (eval mode), in f32."""
    B, T, C = x.shape
    H = w_key.shape[1]
    k = jnp.einsum('btc,ch->bth', x, w_key, precision=_HIGHEST)
    q = jnp.einsum('btc,ch->bth', x, w_query, precision=_HIGHEST)
    v = jnp.einsum('btc,ch->bth', x, w_value, precision=_HIGHEST)
    wei = jnp.einsum('bqh,bkh->bqk', q, k, precision=_HIGHEST) * (H ** -0.5)
    tril = jnp.tril(jnp.ones((block_size, block_size)))
    wei = jnp.where(tril[:T, :T] == 0, -jnp.inf, wei)
    wei = jax.nn.softmax(wei, axis=-1)
    return jnp.einsum('bqk,bkh->bqh', wei, v, precision=_HIGHEST)


if __name__ == "__main__":
    key = jax.random.PRNGKey(0)
    B, T, C = 2, 8, n_embd        # T <= block_size
    head_size = 16

    kx, kk, kq, kv = jax.random.split(key, 4)
    x = jax.random.normal(kx, (B, T, C), dtype=jnp.float32)
    # nn.Linear(n_embd, head_size, bias=False): weight (H, C); we store (C, H)
    bound = 1.0 / (n_embd ** 0.5)
    w_key = jax.random.uniform(kk, (C, head_size), jnp.float32, -bound, bound)
    w_query = jax.random.uniform(kq, (C, head_size), jnp.float32, -bound, bound)
    w_value = jax.random.uniform(kv, (C, head_size), jnp.float32, -bound, bound)

    out = head_forward(x, w_key, w_query, w_value)
    out = jax.block_until_ready(out)

    ref = head_reference(x, w_key, w_query, w_value)
    assert out.shape == (B, T, head_size)
    assert jnp.allclose(out, ref, atol=2e-3, rtol=2e-3), "mismatch vs reference"

    print("KERNEL_OK")
</pallas_src>

<mosaic_0001>
module attributes {stable_mosaic.version = 11 : i64} {
  func.func @head_kernel(%arg0: memref<16x64xf32, #tpu.memory_space<vmem>>, %arg1: memref<64x48xf32, #tpu.memory_space<vmem>>, %arg2: memref<16x16xf32, #tpu.memory_space<vmem>>, %arg3: memref<16x16xf32, #tpu.memory_space<vmem>>) attributes {dimension_semantics = [], scalar_prefetch = 0 : i64, scratch_operands = 0 : i64, tpu.core_type = #tpu.core_type<tc>} {
    %c0 = arith.constant 0 : index
    %c0_0 = arith.constant 0 : index
    %0 = vector.load %arg0[%c0, %c0_0] : memref<16x64xf32, #tpu.memory_space<vmem>>, vector<16x64xf32>
    %c0_1 = arith.constant 0 : index
    %c0_2 = arith.constant 0 : index
    %1 = vector.load %arg1[%c0_1, %c0_2] : memref<64x48xf32, #tpu.memory_space<vmem>>, vector<64x48xf32>
    %cst = arith.constant dense<0.000000e+00> : vector<16x48xf32>
    %2 = tpu.matmul %0, %1, %cst {dimension_numbers = #tpu.dot_dimension_numbers<[1], [0], [0], [1], [0, 0, 1, 1], [], []>, precision = #tpu.contract_precision<fp32>} : vector<16x64xf32>, vector<64x48xf32>, vector<16x48xf32> -> vector<16x48xf32>
    %3 = vector.extract_strided_slice %2 {offsets = [0, 0], sizes = [16, 16], strides = [1, 1]} : vector<16x48xf32> to vector<16x16xf32>
    %4 = vector.extract_strided_slice %2 {offsets = [0, 16], sizes = [16, 16], strides = [1, 1]} : vector<16x48xf32> to vector<16x16xf32>
    %5 = vector.extract_strided_slice %2 {offsets = [0, 32], sizes = [16, 16], strides = [1, 1]} : vector<16x48xf32> to vector<16x16xf32>
    %cst_3 = arith.constant 1.600000e+01 : f32
    %cst_4 = arith.constant -5.000000e-01 : f32
    %6 = math.powf %cst_3, %cst_4 : f32
    %cst_5 = arith.constant dense<0.000000e+00> : vector<16x16xf32>
    %7 = tpu.matmul %4, %3, %cst_5 {dimension_numbers = #tpu.dot_dimension_numbers<[1], [1], [0], [0], [0, 0, 1, 0], [], []>, precision = #tpu.contract_precision<fp32>} : vector<16x16xf32>, vector<16x16xf32>, vector<16x16xf32> -> vector<16x16xf32>
    %8 = vector.broadcast %6 : f32 to vector<16x16xf32>
    %9 = arith.mulf %7, %8 : vector<16x16xf32>
    %c0_6 = arith.constant 0 : index
    %c0_7 = arith.constant 0 : index
    %10 = vector.load %arg2[%c0_6, %c0_7] : memref<16x16xf32, #tpu.memory_space<vmem>>, vector<16x16xf32>
    %cst_8 = arith.constant 0.000000e+00 : f32
    %11 = vector.broadcast %cst_8 : f32 to vector<16x16xf32>
    %12 = arith.cmpf one, %10, %11 : vector<16x16xf32>
    %cst_9 = arith.constant -1.000000e+30 : f32
    %13 = vector.broadcast %cst_9 : f32 to vector<16x16xf32>
    %14 = arith.select %12, %9, %13 : vector<16x16xi1>, vector<16x16xf32>
    %cst_10 = arith.constant dense<0xFF800000> : vector<16xf32>
    %15 = vector.multi_reduction <maximumf>, %14, %cst_10 [1] : vector<16x16xf32> to vector<16xf32>
    %16 = vector.shape_cast %15 : vector<16xf32> to vector<16x1xf32>
    %17 = vector.broadcast %16 : vector<16x1xf32> to vector<16x16xf32>
    %18 = arith.subf %14, %17 : vector<16x16xf32>
    %19 = math.exp %18 : vector<16x16xf32>
    %cst_11 = arith.constant dense<0.000000e+00> : vector<16xf32>
    %20 = vector.multi_reduction <add>, %19, %cst_11 [1] : vector<16x16xf32> to vector<16xf32>
    %21 = vector.shape_cast %20 : vector<16xf32> to vector<16x1xf32>
    %22 = vector.broadcast %21 : vector<16x1xf32> to vector<16x16xf32>
    %23 = arith.divf %19, %22 : vector<16x16xf32>
    %cst_12 = arith.constant dense<0.000000e+00> : vector<16x16xf32>
    %24 = tpu.matmul %23, %5, %cst_12 {dimension_numbers = #tpu.dot_dimension_numbers<[1], [0], [0], [1], [0, 0, 1, 1], [], []>, precision = #tpu.contract_precision<fp32>} : vector<16x16xf32>, vector<16x16xf32>, vector<16x16xf32> -> vector<16x16xf32>
    %c0_13 = arith.constant 0 : index
    %c0_14 = arith.constant 0 : index
    %25 = vector.load %arg3[%c0_13, %c0_14] : memref<16x16xf32, #tpu.memory_space<vmem>>, vector<16x16xf32>
    tpu.vector_store %arg3[%c0_13, %c0_14], %24 {strides = array<i32>} : memref<16x16xf32, #tpu.memory_space<vmem>>, vector<16x16xf32>,
    return
  }
}

</mosaic_0001>

<llo_original>
// kernel: tpu_custom_call.1
$region0: #{tpu_custom_call.1}
  #allocation0 [shape = 'u32[]', space=smem, size = 0x4, offset = 0x4, fixed_abs, tag = 'smem constant byte address 0x4 - core index']
  #allocation1 [shape = 'u32[144,128]{1,0:T(1,128)}', space=vmem, size = 0x12000, scoped, tag = 'internal scratch']
  %s0 = inlined_call_operand.vmem [shape: f32[16,64], index: 0, kind: input, shape index: {}]
  %s1 = inlined_call_operand.vmem [shape: f32[64,48], index: 1, kind: input, shape index: {}]
  %s2 = inlined_call_operand.vmem [shape: f32[16,16], index: 2, kind: input, shape index: {}]
  %s3 = inlined_call_operand.hbm [shape: f32[16,16], index: 3, kind: output, shape index: {}]
  %s4 = sld [smem:[#allocation0]]
  $region22: #{tpu_custom_call.1} parent=0
    _
  %s6 = ssub.s32 1, %s4
  %s7 = scalar_select 0, %s6, %s4
  $region1: #{tpu_custom_call.1} parent=0
    #allocation2 [shape = 'u8[8192]{0}', space=vmem, size = 0x2000, scoped, tag = 'output window, operand 0, single buffered']
    #allocation3 [shape = 's32[1]{0}', space=sflag, size = 0x4, scoped, tag = 'scoped memory for tpu_custom_call.1']
    %8 = vsyncpa [#allocation3], 0
    // Predicated region
    $region2: #{tpu_custom_call.1} parent=1 // pred_check
      _
    $region3: #{tpu_custom_call.1} parent=1 // pred_check_branch
      %10 = sbr.rel (0) target = $region5
    $region4: #{tpu_custom_call.1} parent=1 // pred_region
      _
    $region5: #{tpu_custom_call.1} parent=1 // pred_fallthru
      _
    // Predicated region
    $region6: #{tpu_custom_call.1} parent=1 // pred_check
      _
    $region7: #{tpu_custom_call.1} parent=1 // pred_check_branch
      %12 = sbr.rel (0) target = $region9
    $region8: #{tpu_custom_call.1} parent=1 // pred_region
      _
    $region9: #{tpu_custom_call.1} parent=1 // pred_fallthru
      _
    // Predicated region
    $region10: #{tpu_custom_call.1} parent=1 // pred_check
      _
    $region11: #{tpu_custom_call.1} parent=1 // pred_check_branch
      %14 = sbr.rel (0) target = $region13
    $region12: #{tpu_custom_call.1} parent=1 // pred_region
      _
    $region13: #{tpu_custom_call.1} parent=1 // pred_fallthru
      _
    %v15 = vld [vmem:[%s0] sm:$0xff]
    %v16 = vld [vmem:[%s0 + $0x8] sm:$0xff]
    %v17 = vld [vmem:[%s1] sm:$0xff]
    %v18 = vld [vmem:[%s1 + $0x8] sm:$0xff]
    %v19 = vld [vmem:[%s1 + $0x10] sm:$0xff]
    %v20 = vld [vmem:[%s1 + $0x18] sm:$0xff]
    %v21 = vld [vmem:[%s1 + $0x20] sm:$0xff]
    %v22 = vld [vmem:[%s1 + $0x28] sm:$0xff]
    %v23 = vld [vmem:[%s1 + $0x30] sm:$0xff]
    %v24 = vld [vmem:[%s1 + $0x38] sm:$0xff]
    %vm25 = vcmask 523264
    %v27 = vsel %vm25, %v15, 0
    %v30 = vsel %vm25, %v16, 0
    %32 = vmatprep.subr.mxu0 0.0
    %v33 = vand.u32 %v17, 4294901760
    %34 = vmatpush1.msra.mxu0 %v33
    %35 = vmatprep.subr.mxu0 0.0
    %v36 = vand.u32 %v18, 4294901760
    %37 = vmatpush1.msra.mxu0 %v36
    %38 = vmatprep.subr.mxu0 0.0
    %v39 = vand.u32 %v19, 4294901760
    %40 = vmatpush1.msra.mxu0 %v39
    %41 = vmatprep.subr.mxu0 0.0
    %v42 = vand.u32 %v20, 4294901760
    %43 = vmatpush1.msra.mxu0 %v42
    %44 = vmatprep.subr.mxu0 0.0
    %v45 = vand.u32 %v21, 4294901760
    %46 = vmatpush1.msra.mxu0 %v45
    %47 = vmatprep.subr.mxu0 0.0
    %v48 = vand.u32 %v22, 4294901760
    %49 = vmatpush1.msra.mxu0 %v48
    %50 = vmatprep.subr.mxu0 0.0
    %v51 = vand.u32 %v23, 4294901760
    %52 = vmatpush1.msra.mxu0 %v51
    %53 = vmatprep.subr.mxu0 0.0
    %v54 = vand.u32 %v24, 4294901760
    %55 = vmatpush1.msra.mxu0 %v54
    %56 = vmatprep.subr.mxu0 0.0
    %57 = vmatpush1.msra.mxu0 0.0
    %58 = vmatprep.subr.mxu0 0.0
    %59 = vmatpush1.msra.mxu0 0.0
    %60 = vmatprep.subr.mxu0 0.0
    %61 = vmatpush1.msra.mxu0 0.0
    %62 = vmatprep.subr.mxu0 0.0
    %63 = vmatpush1.msra.mxu0 0.0
    %64 = vmatprep.subr.mxu0 0.0
    %65 = vmatpush1.msra.mxu0 0.0
    %66 = vmatprep.subr.mxu0 0.0
    %67 = vmatpush1.msra.mxu0 0.0
    %68 = vmatprep.subr.mxu0 0.0
    %69 = vmatpush1.msra.mxu0 0.0
    %70 = vmatprep.subr.mxu0 0.0
    %71 = vmatpush1.msra.mxu0 0.0
    %72 = vmatprep.subr.mxu0 0.0
    %73 = vmatpush1.msra.mxu0 0.0
    %74 = vmatprep.subr.mxu0 0.0
    %75 = vmatpush1.msra.mxu0 0.0
    %76 = vmatprep.subr.mxu0 0.0
    %77 = vmatpush1.msra.mxu0 0.0
    %78 = vmatprep.subr.mxu0 0.0
    %79 = vmatpush1.msra.mxu0 0.0
    %80 = vmatprep.subr.mxu0 0.0
    %81 = vmatpush1.msra.mxu0 0.0
    %82 = vmatprep.subr.mxu0 0.0
    %83 = vmatpush1.msra.mxu0 0.0
    %84 = vmatprep.subr.mxu0 0.0
    %85 = vmatpush1.msra.mxu0 0.0
    %86 = vmatprep.subr.mxu0 0.0
    %87 = vmatpush1.msra.mxu0 0.0
    %88 = vmatprep.subr.mxu0 0.0
    %89 = vmatpush1.msra.mxu0 0.0
    %90 = vmatprep.subr.mxu0 0.0
    %91 = vmatpush1.msra.mxu0 0.0
    %92 = vmatprep.subr.mxu0 0.0
    %93 = vmatpush1.msra.mxu0 0.0
    %94 = vmatprep.subr.mxu0 0.0
    %95 = vmatpush1.msra.mxu0 0.0
    %96 = vmatprep.subr.mxu0 0.0
    %97 = vmatpush1.msra.mxu0 0.0
    %98 = vmatprep.subr.mxu0 0.0
    %99 = vmatpush1.msra.mxu0 0.0
    %100 = vmatprep.subr.mxu0 0.0
    %101 = vmatpush1.msra.mxu0 0.0
    %102 = vmatprep.subr.mxu0 0.0
    %103 = vmatpush1.msra.mxu0 0.0
    %104 = vmatprep.mubr.f32.mxu0 0.0
    %v105 = vand.u32 %v27, 4294901760
    %v106 = vsub.f32 %v27, %v105
    %v107 = vand.u32 %v106, 4294901760
    %v108 = vsub.f32 %v106, %v107
    %v109 = vand.u32 %v108, 4294901760
    %110 = vmatmul.mubr.f32.gmra.mrb[0].mxu0 %v109
    %v111 = vpop.f32.mrb[0].mxu0
    %v112 = vadd.f32 0.0, %v111
    %v113 = vpop.f32.mrb[0].mxu0
    %114 = vmatprep.mubr.f32.mxu0 0.0
    %v115 = vand.u32 %v30, 4294901760
    %v116 = vsub.f32 %v30, %v115
    %v117 = vand.u32 %v116, 4294901760
    %v118 = vsub.f32 %v116, %v117
    %v119 = vand.u32 %v118, 4294901760
    %120 = vmatmul.mubr.f32.gmra.mrb[0].mxu0 %v119
    %v121 = vpop.f32.mrb[0].mxu0
    %v122 = vadd.f32 0.0, %v121
    %v123 = vpop.f32.mrb[0].mxu0
    %124 = vdwg.mxu0
    %125 = vmatprep.subr.mxu0 0.0
    %v126 = vand.u32 %v17, 4294901760
    %v127 = vsub.f32 %v17, %v126
    %v128 = vand.u32 %v127, 4294901760
    %v129 = vsub.f32 %v127, %v128
    %v130 = vand.u32 %v129, 4294901760
    %131 = vmatpush1.msra.mxu0 %v130
    %132 = vmatprep.subr.mxu0 0.0
    %v133 = vand.u32 %v18, 4294901760
    %v134 = vsub.f32 %v18, %v133
    %v135 = vand.u32 %v134, 4294901760
    %v136 = vsub.f32 %v134, %v135
    %v137 = vand.u32 %v136, 4294901760
    %138 = vmatpush1.msra.mxu0 %v137
    %139 = vmatprep.subr.mxu0 0.0
    %v140 = vand.u32 %v19, 4294901760
    %v141 = vsub.f32 %v19, %v140
    %v142 = vand.u32 %v141, 4294901760
    %v143 = vsub.f32 %v141, %v142
    %v144 = vand.u32 %v143, 4294901760
    %145 = vmatpush1.msra.mxu0 %v144
    %146 = vmatprep.subr.mxu0 0.0
    %v147 = vand.u32 %v20, 4294901760
    %v148 = vsub.f32 %v20, %v147
    %v149 = vand.u32 %v148, 4294901760
    %v150 = vsub.f32 %v148, %v149
    %v151 = vand.u32 %v150, 4294901760
    %152 = vmatpush1.msra.mxu0 %v151
    %153 = vmatprep.subr.mxu0 0.0
    %v154 = vand.u32 %v21, 4294901760
    %v155 = vsub.f32 %v21, %v154
    %v156 = vand.u32 %v155, 4294901760
    %v157 = vsub.f32 %v155, %v156
    %v158 = vand.u32 %v157, 4294901760
    %159 = vmatpush1.msra.mxu0 %v158
    %160 = vmatprep.subr.mxu0 0.0
    %v161 = vand.u32 %v22, 4294901760
    %v162 = vsub.f32 %v22, %v161
    %v163 = vand.u32 %v162, 4294901760
    %v164 = vsub.f32 %v162, %v163
    %v165 = vand.u32 %v164, 4294901760
    %166 = vmatpush1.msra.mxu0 %v165
    %167 = vmatprep.subr.mxu0 0.0
    %v168 = vand.u32 %v23, 4294901760
    %v169 = vsub.f32 %v23, %v168
    %v170 = vand.u32 %v169, 4294901760
    %v171 = vsub.f32 %v169, %v170
    %v172 = vand.u32 %v171, 4294901760
    %173 = vmatpush1.msra.mxu0 %v172
    %174 = vmatprep.subr.mxu0 0.0
    %v175 = vand.u32 %v24, 4294901760
    %v176 = vsub.f32 %v24, %v175
    %v177 = vand.u32 %v176, 4294901760
    %v178 = vsub.f32 %v176, %v177
    %v179 = vand.u32 %v178, 4294901760
    %180 = vmatpush1.msra.mxu0 %v179
    %181 = vmatprep.subr.mxu0 0.0
    %182 = vmatpush1.msra.mxu0 0.0
    %183 = vmatprep.subr.mxu0 0.0
    %184 = vmatpush1.msra.mxu0 0.0
    %185 = vmatprep.subr.mxu0 0.0
    %186 = vmatpush1.msra.mxu0 0.0
    %187 = vmatprep.subr.mxu0 0.0
    %188 = vmatpush1.msra.mxu0 0.0
    %189 = vmatprep.subr.mxu0 0.0
    %190 = vmatpush1.msra.mxu0 0.0
    %191 = vmatprep.subr.mxu0 0.0
    %192 = vmatpush1.msra.mxu0 0.0
    %193 = vmatprep.subr.mxu0 0.0
    %194 = vmatpush1.msra.mxu0 0.0
    %195 = vmatprep.subr.mxu0 0.0
    %196 = vmatpush1.msra.mxu0 0.0
    %197 = vmatprep.subr.mxu0 0.0
    %198 = vmatpush1.msra.mxu0 0.0
    %199 = vmatprep.subr.mxu0 0.0
    %200 = vmatpush1.msra.mxu0 0.0
    %201 = vmatprep.subr.mxu0 0.0
    %202 = vmatpush1.msra.mxu0 0.0
    %203 = vmatprep.subr.mxu0 0.0
    %204 = vmatpush1.msra.mxu0 0.0
    %205 = vmatprep.subr.mxu0 0.0
    %206 = vmatpush1.msra.mxu0 0.0
    %207 = vmatprep.subr.mxu0 0.0
    %208 = vmatpush1.msra.mxu0 0.0
    %209 = vmatprep.subr.mxu0 0.0
    %210 = vmatpush1.msra.mxu0 0.0
    %211 = vmatprep.subr.mxu0 0.0
    %212 = vmatpush1.msra.mxu0 0.0
    %213 = vmatprep.subr.mxu0 0.0
    %214 = vmatpush1.msra.mxu0 0.0
    %215 = vmatprep.subr.mxu0 0.0
    %216 = vmatpush1.msra.mxu0 0.0
    %217 = vmatprep.subr.mxu0 0.0
    %218 = vmatpush1.msra.mxu0 0.0
    %219 = vmatprep.subr.mxu0 0.0
    %220 = vmatpush1.msra.mxu0 0.0
    %221 = vmatprep.subr.mxu0 0.0
    %222 = vmatpush1.msra.mxu0 0.0
    %223 = vmatprep.subr.mxu0 0.0
    %224 = vmatpush1.msra.mxu0 0.0
    %225 = vmatprep.subr.mxu0 0.0
    %226 = vmatpush1.msra.mxu0 0.0
    %227 = vmatprep.subr.mxu0 0.0
    %228 = vmatpush1.msra.mxu0 0.0
    %229 = vmatprep.mubr.f32.mxu0 0.0
    %v230 = vand.u32 %v27, 4294901760
    %231 = vmatmul.mubr.f32.gmra.mrb[0].mxu0 %v230
    %v232 = vpop.f32.mrb[0].mxu0
    %v233 = vadd.f32 %v112, %v232
    %v234 = vpop.f32.mrb[0].mxu0
    %235 = vmatprep.mubr.f32.mxu0 0.0
    %v236 = vand.u32 %v30, 4294901760
    %237 = vmatmul.mubr.f32.gmra.mrb[0].mxu0 %v236
    %v238 = vpop.f32.mrb[0].mxu0
    %v239 = vadd.f32 %v122, %v238
    %v240 = vpop.f32.mrb[0].mxu0
    %241 = vdwg.mxu0
    %242 = vmatprep.subr.mxu0 0.0
    %v243 = vand.u32 %v17, 4294901760
    %v244 = vsub.f32 %v17, %v243
    %245 = vmatpush1.msra.mxu0 %v244
    %246 = vmatprep.subr.mxu0 0.0
    %v247 = vand.u32 %v18, 4294901760
    %v248 = vsub.f32 %v18, %v247
    %249 = vmatpush1.msra.mxu0 %v248
    %250 = vmatprep.subr.mxu0 0.0
    %v251 = vand.u32 %v19, 4294901760
    %v252 = vsub.f32 %v19, %v251
    %253 = vmatpush1.msra.mxu0 %v252
    %254 = vmatprep.subr.mxu0 0.0
    %v255 = vand.u32 %v20, 4294901760
    %v256 = vsub.f32 %v20, %v255
    %257 = vmatpush1.msra.mxu0 %v256
    %258 = vmatprep.subr.mxu0 0.0
    %v259 = vand.u32 %v21, 4294901760
    %v260 = vsub.f32 %v21, %v259
    %261 = vmatpush1.msra.mxu0 %v260
    %262 = vmatprep.subr.mxu0 0.0
    %v263 = vand.u32 %v22, 4294901760
    %v264 = vsub.f32 %v22, %v263
    %265 = vmatpush1.msra.mxu0 %v264
    %266 = vmatprep.subr.mxu0 0.0
    %v267 = vand.u32 %v23, 4294901760
    %v268 = vsub.f32 %v23, %v267
    %269 = vmatpush1.msra.mxu0 %v268
    %270 = vmatprep.subr.mxu0 0.0
    %v271 = vand.u32 %v24, 4294901760
    %v272 = vsub.f32 %v24, %v271
    %273 = vmatpush1.msra.mxu0 %v272
    %274 = vmatprep.subr.mxu0 0.0
    %275 = vmatpush1.msra.mxu0 0.0
    %276 = vmatprep.subr.mxu0 0.0
    %277 = vmatpush1.msra.mxu0 0.0
    %278 = vmatprep.subr.mxu0 0.0
    %279 = vmatpush1.msra.mxu0 0.0
    %280 = vmatprep.subr.mxu0 0.0
    %281 = vmatpush1.msra.mxu0 0.0
    %282 = vmatprep.subr.mxu0 0.0
    %283 = vmatpush1.msra.mxu0 0.0
    %284 = vmatprep.subr.mxu0 0.0
    %285 = vmatpush1.msra.mxu0 0.0
    %286 = vmatprep.subr.mxu0 0.0
    %287 = vmatpush1.msra.mxu0 0.0
    %288 = vmatprep.subr.mxu0 0.0
    %289 = vmatpush1.msra.mxu0 0.0
    %290 = vmatprep.subr.mxu0 0.0
    %291 = vmatpush1.msra.mxu0 0.0
    %292 = vmatprep.subr.mxu0 0.0
    %293 = vmatpush1.msra.mxu0 0.0
    %294 = vmatprep.subr.mxu0 0.0
    %295 = vmatpush1.msra.mxu0 0.0
    %296 = vmatprep.subr.mxu0 0.0
    %297 = vmatpush1.msra.mxu0 0.0
    %298 = vmatprep.subr.mxu0 0.0
    %299 = vmatpush1.msra.mxu0 0.0
    %300 = vmatprep.subr.mxu0 0.0
    %301 = vmatpush1.msra.mxu0 0.0
    %302 = vmatprep.subr.mxu0 0.0
    %303 = vmatpush1.msra.mxu0 0.0
    %304 = vmatprep.subr.mxu0 0.0
    %305 = vmatpush1.msra.mxu0 0.0
    %306 = vmatprep.subr.mxu0 0.0
    %307 = vmatpush1.msra.mxu0 0.0
    %308 = vmatprep.subr.mxu0 0.0
    %309 = vmatpush1.msra.mxu0 0.0
    %310 = vmatprep.subr.mxu0 0.0
    %311 = vmatpush1.msra.mxu0 0.0
    %312 = vmatprep.subr.mxu0 0.0
    %313 = vmatpush1.msra.mxu0 0.0
    %314 = vmatprep.subr.mxu0 0.0
    %315 = vmatpush1.msra.mxu0 0.0
    %316 = vmatprep.subr.mxu0 0.0
    %317 = vmatpush1.msra.mxu0 0.0
    %318 = vmatprep.subr.mxu0 0.0
    %319 = vmatpush1.msra.mxu0 0.0
    %320 = vmatprep.subr.mxu0 0.0
    %321 = vmatpush1.msra.mxu0 0.0
    %322 = vmatprep.mubr.f32.mxu0 0.0
    %v323 = vand.u32 %v27, 4294901760
    %v324 = vsub.f32 %v27, %v323
    %325 = vmatmul.mubr.f32.gmra.mrb[0].mxu0 %v324
    %v326 = vpop.f32.mrb[0].mxu0
    %v327 = vadd.f32 %v233, %v326
    %v328 = vpop.f32.mrb[0].mxu0
    %329 = vmatprep.mubr.f32.mxu0 0.0
    %v330 = vand.u32 %v30, 4294901760
    %v331 = vsub.f32 %v30, %v330
    %332 = vmatmul.mubr.f32.gmra.mrb[0].mxu0 %v331
    %v333 = vpop.f32.mrb[0].mxu0
    %v334 = vadd.f32 %v239, %v333
    %v335 = vpop.f32.mrb[0].mxu0
    %336 = vdwg.mxu0
    %337 = vmatprep.subr.mxu0 0.0
    %v338 = vand.u32 %v17, 4294901760
    %339 = vmatpush1.msra.mxu0 %v338
    %340 = vmatprep.subr.mxu0 0.0
    %v341 = vand.u32 %v18, 4294901760
    %342 = vmatpush1.msra.mxu0 %v341
    %343 = vmatprep.subr.mxu0 0.0
    %v344 = vand.u32 %v19, 4294901760
    %345 = vmatpush1.msra.mxu0 %v344
    %346 = vmatprep.subr.mxu0 0.0
    %v347 = vand.u32 %v20, 4294901760
    %348 = vmatpush1.msra.mxu0 %v347
    %349 = vmatprep.subr.mxu0 0.0
    %v350 = vand.u32 %v21, 4294901760
    %351 = vmatpush1.msra.mxu0 %v350
    %352 = vmatprep.subr.mxu0 0.0
    %v353 = vand.u32 %v22, 4294901760
    %354 = vmatpush1.msra.mxu0 %v353
    %355 = vmatprep.subr.mxu0 0.0
    %v356 = vand.u32 %v23, 4294901760
    %357 = vmatpush1.msra.mxu0 %v356
    %358 = vmatprep.subr.mxu0 0.0
    %v359 = vand.u32 %v24, 4294901760
    %360 = vmatpush1.msra.mxu0 %v359
    %361 = vmatprep.subr.mxu0 0.0
    %362 = vmatpush1.msra.mxu0 0.0
    %363 = vmatprep.subr.mxu0 0.0
    %364 = vmatpush1.msra.mxu0 0.0
    %365 = vmatprep.subr.mxu0 0.0
    %366 = vmatpush1.msra.mxu0 0.0
    %367 = vmatprep.subr.mxu0 0.0
    %368 = vmatpush1.msra.mxu0 0.0
    %369 = vmatprep.subr.mxu0 0.0
    %370 = vmatpush1.msra.mxu0 0.0
    %371 = vmatprep.subr.mxu0 0.0
    %372 = vmatpush1.msra.mxu0 0.0
    %373 = vmatprep.subr.mxu0 0.0
    %374 = vmatpush1.msra.mxu0 0.0
    %375 = vmatprep.subr.mxu0 0.0
    %376 = vmatpush1.msra.mxu0 0.0
    %377 = vmatprep.subr.mxu0 0.0
    %378 = vmatpush1.msra.mxu0 0.0
    %379 = vmatprep.subr.mxu0 0.0
    %380 = vmatpush1.msra.mxu0 0.0
    %381 = vmatprep.subr.mxu0 0.0
    %382 = vmatpush1.msra.mxu0 0.0
    %383 = vmatprep.subr.mxu0 0.0
    %384 = vmatpush1.msra.mxu0 0.0
    %385 = vmatprep.subr.mxu0 0.0
    %386 = vmatpush1.msra.mxu0 0.0
    %387 = vmatprep.subr.mxu0 0.0
    %388 = vmatpush1.msra.mxu0 0.0
    %389 = vmatprep.subr.mxu0 0.0
    %390 = vmatpush1.msra.mxu0 0.0
    %391 = vmatprep.subr.mxu0 0.0
    %392 = vmatpush1.msra.mxu0 0.0
    %393 = vmatprep.subr.mxu0 0.0
    %394 = vmatpush1.msra.mxu0 0.0
    %395 = vmatprep.subr.mxu0 0.0
    %396 = vmatpush1.msra.mxu0 0.0
    %397 = vmatprep.subr.mxu0 0.0
    %398 = vmatpush1.msra.mxu0 0.0
    %399 = vmatprep.subr.mxu0 0.0
    %400 = vmatpush1.msra.mxu0 0.0
    %401 = vmatprep.subr.mxu0 0.0
    %402 = vmatpush1.msra.mxu0 0.0
    %403 = vmatprep.subr.mxu0 0.0
    %404 = vmatpush1.msra.mxu0 0.0
    %405 = vmatprep.subr.mxu0 0.0
    %406 = vmatpush1.msra.mxu0 0.0
    %407 = vmatprep.subr.mxu0 0.0
    %408 = vmatpush1.msra.mxu0 0.0
    %409 = vmatprep.mubr.f32.mxu0 0.0
    %v410 = vand.u32 %v27, 4294901760
    %v411 = vsub.f32 %v27, %v410
    %v412 = vand.u32 %v411, 4294901760
    %413 = vmatmul.mubr.f32.gmra.mrb[0].mxu0 %v412
    %v414 = vpop.f32.mrb[0].mxu0
    %v415 = vadd.f32 %v327, %v414
    %v416 = vpop.f32.mrb[0].mxu0
    %417 = vmatprep.mubr.f32.mxu0 0.0
    %v418 = vand.u32 %v30, 4294901760
    %v419 = vsub.f32 %v30, %v418
    %v420 = vand.u32 %v419, 4294901760
    %421 = vmatmul.mubr.f32.gmra.mrb[0].mxu0 %v420
    %v422 = vpop.f32.mrb[0].mxu0
    %v423 = vadd.f32 %v334, %v422
    %v424 = vpop.f32.mrb[0].mxu0
    %425 = vdwg.mxu0
    %426 = vmatprep.subr.mxu0 0.0
    %v427 = vand.u32 %v17, 4294901760
    %v428 = vsub.f32 %v17, %v427
    %v429 = vand.u32 %v428, 4294901760
    %430 = vmatpush1.msra.mxu0 %v429
    %431 = vmatprep.subr.mxu0 0.0
    %v432 = vand.u32 %v18, 4294901760
    %v433 = vsub.f32 %v18, %v432
    %v434 = vand.u32 %v433, 4294901760
    %435 = vmatpush1.msra.mxu0 %v434
    %436 = vmatprep.subr.mxu0 0.0
    %v437 = vand.u32 %v19, 4294901760
    %v438 = vsub.f32 %v19, %v437
    %v439 = vand.u32 %v438, 4294901760
    %440 = vmatpush1.msra.mxu0 %v439
    %441 = vmatprep.subr.mxu0 0.0
    %v442 = vand.u32 %v20, 4294901760
    %v443 = vsub.f32 %v20, %v442
    %v444 = vand.u32 %v443, 4294901760
    %445 = vmatpush1.msra.mxu0 %v444
    %446 = vmatprep.subr.mxu0 0.0
    %v447 = vand.u32 %v21, 4294901760
    %v448 = vsub.f32 %v21, %v447
    %v449 = vand.u32 %v448, 4294901760
    %450 = vmatpush1.msra.mxu0 %v449
    %451 = vmatprep.subr.mxu0 0.0
    %v452 = vand.u32 %v22, 4294901760
    %v453 = vsub.f32 %v22, %v452
    %v454 = vand.u32 %v453, 4294901760
    %455 = vmatpush1.msra.mxu0 %v454
    %456 = vmatprep.subr.mxu0 0.0
    %v457 = vand.u32 %v23, 4294901760
    %v458 = vsub.f32 %v23, %v457
    %v459 = vand.u32 %v458, 4294901760
    %460 = vmatpush1.msra.mxu0 %v459
    %461 = vmatprep.subr.mxu0 0.0
    %v462 = vand.u32 %v24, 4294901760
    %v463 = vsub.f32 %v24, %v462
    %v464 = vand.u32 %v463, 4294901760
    %465 = vmatpush1.msra.mxu0 %v464
    %466 = vmatprep.subr.mxu0 0.0
    %467 = vmatpush1.msra.mxu0 0.0
    %468 = vmatprep.subr.mxu0 0.0
    %469 = vmatpush1.msra.mxu0 0.0
    %470 = vmatprep.subr.mxu0 0.0
    %471 = vmatpush1.msra.mxu0 0.0
    %472 = vmatprep.subr.mxu0 0.0
    %473 = vmatpush1.msra.mxu0 0.0
    %474 = vmatprep.subr.mxu0 0.0
    %475 = vmatpush1.msra.mxu0 0.0
    %476 = vmatprep.subr.mxu0 0.0
    %477 = vmatpush1.msra.mxu0 0.0
    %478 = vmatprep.subr.mxu0 0.0
    %479 = vmatpush1.msra.mxu0 0.0
    %480 = vmatprep.subr.mxu0 0.0
    %481 = vmatpush1.msra.mxu0 0.0
    %482 = vmatprep.subr.mxu0 0.0
    %483 = vmatpush1.msra.mxu0 0.0
    %484 = vmatprep.subr.mxu0 0.0
    %485 = vmatpush1.msra.mxu0 0.0
    %486 = vmatprep.subr.mxu0 0.0
    %487 = vmatpush1.msra.mxu0 0.0
    %488 = vmatprep.subr.mxu0 0.0
    %489 = vmatpush1.msra.mxu0 0.0
    %490 = vmatprep.subr.mxu0 0.0
    %491 = vmatpush1.msra.mxu0 0.0
    %492 = vmatprep.subr.mxu0 0.0
    %493 = vmatpush1.msra.mxu0 0.0
    %494 = vmatprep.subr.mxu0 0.0
    %495 = vmatpush1.msra.mxu0 0.0
    %496 = vmatprep.subr.mxu0 0.0
    %497 = vmatpush1.msra.mxu0 0.0
    %498 = vmatprep.subr.mxu0 0.0
    %499 = vmatpush1.msra.mxu0 0.0
    %500 = vmatprep.subr.mxu0 0.0
    %501 = vmatpush1.msra.mxu0 0.0
    %502 = vmatprep.subr.mxu0 0.0
    %503 = vmatpush1.msra.mxu0 0.0
    %504 = vmatprep.subr.mxu0 0.0
    %505 = vmatpush1.msra.mxu0 0.0
    %506 = vmatprep.subr.mxu0 0.0
    %507 = vmatpush1.msra.mxu0 0.0
    %508 = vmatprep.subr.mxu0 0.0
    %509 = vmatpush1.msra.mxu0 0.0
    %510 = vmatprep.subr.mxu0 0.0
    %511 = vmatpush1.msra.mxu0 0.0
    %512 = vmatprep.subr.mxu0 0.0
    %513 = vmatpush1.msra.mxu0 0.0
    %514 = vmatprep.mubr.f32.mxu0 0.0
    %v515 = vand.u32 %v27, 4294901760
    %516 = vmatmul.mubr.f32.gmra.mrb[0].mxu0 %v515
    %v517 = vpop.f32.mrb[0].mxu0
    %v518 = vadd.f32 %v415, %v517
    %v519 = vpop.f32.mrb[0].mxu0
    %520 = vmatprep.mubr.f32.mxu0 0.0
    %v521 = vand.u32 %v30, 4294901760
    %522 = vmatmul.mubr.f32.gmra.mrb[0].mxu0 %v521
    %v523 = vpop.f32.mrb[0].mxu0
    %v524 = vadd.f32 %v423, %v523
    %v525 = vpop.f32.mrb[0].mxu0
    %526 = vdwg.mxu0
    %527 = vmatprep.subr.mxu0 0.0
    %v528 = vand.u32 %v17, 4294901760
    %529 = vmatpush1.msra.mxu0 %v528
    %530 = vmatprep.subr.mxu0 0.0
    %v531 = vand.u32 %v18, 4294901760
    %532 = vmatpush1.msra.mxu0 %v531
    %533 = vmatprep.subr.mxu0 0.0
    %v534 = vand.u32 %v19, 4294901760
    %535 = vmatpush1.msra.mxu0 %v534
    %536 = vmatprep.subr.mxu0 0.0
    %v537 = vand.u32 %v20, 4294901760
    %538 = vmatpush1.msra.mxu0 %v537
    %539 = vmatprep.subr.mxu0 0.0
    %v540 = vand.u32 %v21, 4294901760
    %541 = vmatpush1.msra.mxu0 %v540
    %542 = vmatprep.subr.mxu0 0.0
    %v543 = vand.u32 %v22, 4294901760
    %544 = vmatpush1.msra.mxu0 %v543
    %545 = vmatprep.subr.mxu0 0.0
    %v546 = vand.u32 %v23, 4294901760
    %547 = vmatpush1.msra.mxu0 %v546
    %548 = vmatprep.subr.mxu0 0.0
    %v549 = vand.u32 %v24, 4294901760
    %550 = vmatpush1.msra.mxu0 %v549
    %551 = vmatprep.subr.mxu0 0.0
    %552 = vmatpush1.msra.mxu0 0.0
    %553 = vmatprep.subr.mxu0 0.0
    %554 = vmatpush1.msra.mxu0 0.0
    %555 = vmatprep.subr.mxu0 0.0
    %556 = vmatpush1.msra.mxu0 0.0
    %557 = vmatprep.subr.mxu0 0.0
    %558 = vmatpush1.msra.mxu0 0.0
    %559 = vmatprep.subr.mxu0 0.0
    %560 = vmatpush1.msra.mxu0 0.0
    %561 = vmatprep.subr.mxu0 0.0
    %562 = vmatpush1.msra.mxu0 0.0
    %563 = vmatprep.subr.mxu0 0.0
    %564 = vmatpush1.msra.mxu0 0.0
    %565 = vmatprep.subr.mxu0 0.0
    %566 = vmatpush1.msra.mxu0 0.0
    %567 = vmatprep.subr.mxu0 0.0
    %568 = vmatpush1.msra.mxu0 0.0
    %569 = vmatprep.subr.mxu0 0.0
    %570 = vmatpush1.msra.mxu0 0.0
    %571 = vmatprep.subr.mxu0 0.0
    %572 = vmatpush1.msra.mxu0 0.0
    %573 = vmatprep.subr.mxu0 0.0
    %574 = vmatpush1.msra.mxu0 0.0
    %575 = vmatprep.subr.mxu0 0.0
    %576 = vmatpush1.msra.mxu0 0.0
    %577 = vmatprep.subr.mxu0 0.0
    %578 = vmatpush1.msra.mxu0 0.0
    %579 = vmatprep.subr.mxu0 0.0
    %580 = vmatpush1.msra.mxu0 0.0
    %581 = vmatprep.subr.mxu0 0.0
    %582 = vmatpush1.msra.mxu0 0.0
    %583 = vmatprep.subr.mxu0 0.0
    %584 = vmatpush1.msra.mxu0 0.0
    %585 = vmatprep.subr.mxu0 0.0
    %586 = vmatpush1.msra.mxu0 0.0
    %587 = vmatprep.subr.mxu0 0.0
    %588 = vmatpush1.msra.mxu0 0.0
    %589 = vmatprep.subr.mxu0 0.0
    %590 = vmatpush1.msra.mxu0 0.0
    %591 = vmatprep.subr.mxu0 0.0
    %592 = vmatpush1.msra.mxu0 0.0
    %593 = vmatprep.subr.mxu0 0.0
    %594 = vmatpush1.msra.mxu0 0.0
    %595 = vmatprep.subr.mxu0 0.0
    %596 = vmatpush1.msra.mxu0 0.0
    %597 = vmatprep.subr.mxu0 0.0
    %598 = vmatpush1.msra.mxu0 0.0
    %599 = vmatprep.mubr.f32.mxu0 0.0
    %v600 = vand.u32 %v27, 4294901760
    %601 = vmatmul.mubr.f32.gmra.mrb[0].mxu0 %v600
    %v602 = vpop.f32.mrb[0].mxu0
    %v603 = vadd.f32 %v518, %v602
    %v604 = vpop.f32.mrb[0].mxu0
    %605 = vmatprep.mubr.f32.mxu0 0.0
    %v606 = vand.u32 %v30, 4294901760
    %607 = vmatmul.mubr.f32.gmra.mrb[0].mxu0 %v606
    %v608 = vpop.f32.mrb[0].mxu0
    %v609 = vadd.f32 %v524, %v608
    %v610 = vpop.f32.mrb[0].mxu0
    %611 = vdwg.mxu0
    %614 = vrot.lane.b32.xlu0 %v603, 112
    %v615 = vpop.permute.xlu0 %614
    %616 = vrot.lane.b32.xlu0 %v609, 112
    %v617 = vpop.permute.xlu0 %616
    %vm618 = vcmask 130048
    %v619 = vsel %vm618, %v615, 0
    %v621 = vsel %vm618, %v617, 0
    %v623 = vsel %vm618, %v603, 0
    %v625 = vsel %vm618, %v609, 0
    %627 = vmatprep.subr.mxu0 0.0
    %v628 = vand.u32 %v623, 4294901760
    %629 = vmatpush1.xpose.msra.mxu0 %v628
    %630 = vmatprep.subr.mxu0 0.0
    %v631 = vand.u32 %v625, 4294901760
    %632 = vmatpush1.xpose.msra.mxu0 %v631
    %633 = vmatprep.subr.mxu0 0.0
    %634 = vmatpush1.xpose.msra.mxu0 0.0
    %635 = vmatprep.subr.mxu0 0.0
    %636 = vmatpush1.xpose.msra.mxu0 0.0
    %637 = vmatprep.subr.mxu0 0.0
    %638 = vmatpush1.xpose.msra.mxu0 0.0
    %639 = vmatprep.subr.mxu0 0.0
    %640 = vmatpush1.xpose.msra.mxu0 0.0
    %641 = vmatprep.subr.mxu0 0.0
    %642 = vmatpush1.xpose.msra.mxu0 0.0
    %643 = vmatprep.subr.mxu0 0.0
    %644 = vmatpush1.xpose.msra.mxu0 0.0
    %645 = vmatprep.subr.mxu0 0.0
    %646 = vmatpush1.xpose.msra.mxu0 0.0
    %647 = vmatprep.subr.mxu0 0.0
    %648 = vmatpush1.xpose.msra.mxu0 0.0
    %649 = vmatprep.subr.mxu0 0.0
    %650 = vmatpush1.xpose.msra.mxu0 0.0
    %651 = vmatprep.subr.mxu0 0.0
    %652 = vmatpush1.xpose.msra.mxu0 0.0
    %653 = vmatprep.subr.mxu0 0.0
    %654 = vmatpush1.xpose.msra.mxu0 0.0
    %655 = vmatprep.subr.mxu0 0.0
    %656 = vmatpush1.xpose.msra.mxu0 0.0
    %657 = vmatprep.subr.mxu0 0.0
    %658 = vmatpush1.xpose.msra.mxu0 0.0
    %659 = vmatprep.subr.mxu0 0.0
    %660 = vmatpush1.xpose.msra.mxu0 0.0
    %661 = vmatprep.subr.mxu0 0.0
    %662 = vmatpush1.xpose.msra.mxu0 0.0
    %663 = vmatprep.subr.mxu0 0.0
    %664 = vmatpush1.xpose.msra.mxu0 0.0
    %665 = vmatprep.subr.mxu0 0.0
    %666 = vmatpush1.xpose.msra.mxu0 0.0
    %667 = vmatprep.subr.mxu0 0.0
    %668 = vmatpush1.xpose.msra.mxu0 0.0
    %669 = vmatprep.subr.mxu0 0.0
    %670 = vmatpush1.xpose.msra.mxu0 0.0
    %671 = vmatprep.subr.mxu0 0.0
    %672 = vmatpush1.xpose.msra.mxu0 0.0
    %673 = vmatprep.subr.mxu0 0.0
    %674 = vmatpush1.xpose.msra.mxu0 0.0
    %675 = vmatprep.subr.mxu0 0.0
    %676 = vmatpush1.xpose.msra.mxu0 0.0
    %677 = vmatprep.subr.mxu0 0.0
    %678 = vmatpush1.xpose.msra.mxu0 0.0
    %679 = vmatprep.subr.mxu0 0.0
    %680 = vmatpush1.xpose.msra.mxu0 0.0
    %681 = vmatprep.subr.mxu0 0.0
    %682 = vmatpush1.xpose.msra.mxu0 0.0
    %683 = vmatprep.subr.mxu0 0.0
    %684 = vmatpush1.xpose.msra.mxu0 0.0
    %685 = vmatprep.subr.mxu0 0.0
    %686 = vmatpush1.xpose.msra.mxu0 0.0
    %687 = vmatprep.subr.mxu0 0.0
    %688 = vmatpush1.xpose.msra.mxu0 0.0
    %689 = vmatprep.subr.mxu0 0.0
    %690 = vmatpush1.xpose.msra.mxu0 0.0
    %691 = vmatprep.subr.mxu0 0.0
    %692 = vmatpush1.xpose.msra.mxu0 0.0
    %693 = vmatprep.mubr.f32.mxu0 0.0
    %v694 = vand.u32 %v619, 4294901760
    %v695 = vsub.f32 %v619, %v694
    %v696 = vand.u32 %v695, 4294901760
    %v697 = vsub.f32 %v695, %v696
    %v698 = vand.u32 %v697, 4294901760
    %699 = vmatmul.mubr.f32.gmra.mrb[0].mxu0 %v698
    %v700 = vpop.f32.mrb[0].mxu0
    %v701 = vadd.f32 0.0, %v700
    %v702 = vpop.f32.mrb[0].mxu0
    %703 = vmatprep.mubr.f32.mxu0 0.0
    %v704 = vand.u32 %v621, 4294901760
    %v705 = vsub.f32 %v621, %v704
    %v706 = vand.u32 %v705, 4294901760
    %v707 = vsub.f32 %v705, %v706
    %v708 = vand.u32 %v707, 4294901760
    %709 = vmatmul.mubr.f32.gmra.mrb[0].mxu0 %v708
    %v710 = vpop.f32.mrb[0].mxu0
    %v711 = vadd.f32 0.0, %v710
    %v712 = vpop.f32.mrb[0].mxu0
    %713 = vdwg.mxu0
    %714 = vmatprep.subr.mxu0 0.0
    %v715 = vand.u32 %v623, 4294901760
    %v716 = vsub.f32 %v623, %v715
    %v717 = vand.u32 %v716, 4294901760
    %v718 = vsub.f32 %v716, %v717
    %v719 = vand.u32 %v718, 4294901760
    %720 = vmatpush1.xpose.msra.mxu0 %v719
    %721 = vmatprep.subr.mxu0 0.0
    %v722 = vand.u32 %v625, 4294901760
    %v723 = vsub.f32 %v625, %v722
    %v724 = vand.u32 %v723, 4294901760
    %v725 = vsub.f32 %v723, %v724
    %v726 = vand.u32 %v725, 4294901760
    %727 = vmatpush1.xpose.msra.mxu0 %v726
    %728 = vmatprep.subr.mxu0 0.0
    %729 = vmatpush1.xpose.msra.mxu0 0.0
    %730 = vmatprep.subr.mxu0 0.0
    %731 = vmatpush1.xpose.msra.mxu0 0.0
    %732 = vmatprep.subr.mxu0 0.0
    %733 = vmatpush1.xpose.msra.mxu0 0.0
    %734 = vmatprep.subr.mxu0 0.0
    %735 = vmatpush1.xpose.msra.mxu0 0.0
    %736 = vmatprep.subr.mxu0 0.0
    %737 = vmatpush1.xpose.msra.mxu0 0.0
    %738 = vmatprep.subr.mxu0 0.0
    %739 = vmatpush1.xpose.msra.mxu0 0.0
    %740 = vmatprep.subr.mxu0 0.0
    %741 = vmatpush1.xpose.msra.mxu0 0.0
    %742 = vmatprep.subr.mxu0 0.0
    %743 = vmatpush1.xpose.msra.mxu0 0.0
    %744 = vmatprep.subr.mxu0 0.0
    %745 = vmatpush1.xpose.msra.mxu0 0.0
    %746 = vmatprep.subr.mxu0 0.0
    %747 = vmatpush1.xpose.msra.mxu0 0.0
    %748 = vmatprep.subr.mxu0 0.0
    %749 = vmatpush1.xpose.msra.mxu0 0.0
    %750 = vmatprep.subr.mxu0 0.0
    %751 = vmatpush1.xpose.msra.mxu0 0.0
    %752 = vmatprep.subr.mxu0 0.0
    %753 = vmatpush1.xpose.msra.mxu0 0.0
    %754 = vmatprep.subr.mxu0 0.0
    %755 = vmatpush1.xpose.msra.mxu0 0.0
    %756 = vmatprep.subr.mxu0 0.0
    %757 = vmatpush1.xpose.msra.mxu0 0.0
    %758 = vmatprep.subr.mxu0 0.0
    %759 = vmatpush1.xpose.msra.mxu0 0.0
    %760 = vmatprep.subr.mxu0 0.0
    %761 = vmatpush1.xpose.msra.mxu0 0.0
    %762 = vmatprep.subr.mxu0 0.0
    %763 = vmatpush1.xpose.msra.mxu0 0.0
    %764 = vmatprep.subr.mxu0 0.0
    %765 = vmatpush1.xpose.msra.mxu0 0.0
    %766 = vmatprep.subr.mxu0 0.0
    %767 = vmatpush1.xpose.msra.mxu0 0.0
    %768 = vmatprep.subr.mxu0 0.0
    %769 = vmatpush1.xpose.msra.mxu0 0.0
    %770 = vmatprep.subr.mxu0 0.0
    %771 = vmatpush1.xpose.msra.mxu0 0.0
    %772 = vmatprep.subr.mxu0 0.0
    %773 = vmatpush1.xpose.msra.mxu0 0.0
    %774 = vmatprep.subr.mxu0 0.0
    %775 = vmatpush1.xpose.msra.mxu0 0.0
    %776 = vmatprep.subr.mxu0 0.0
    %777 = vmatpush1.xpose.msra.mxu0 0.0
    %778 = vmatprep.subr.mxu0 0.0
    %779 = vmatpush1.xpose.msra.mxu0 0.0
    %780 = vmatprep.subr.mxu0 0.0
    %781 = vmatpush1.xpose.msra.mxu0 0.0
    %782 = vmatprep.subr.mxu0 0.0
    %783 = vmatpush1.xpose.msra.mxu0 0.0
    %784 = vmatprep.subr.mxu0 0.0
    %785 = vmatpush1.xpose.msra.mxu0 0.0
    %786 = vmatprep.subr.mxu0 0.0
    %787 = vmatpush1.xpose.msra.mxu0 0.0
    %788 = vmatprep.mubr.f32.mxu0 0.0
    %v789 = vand.u32 %v619, 4294901760
    %790 = vmatmul.mubr.f32.gmra.mrb[0].mxu0 %v789
    %v791 = vpop.f32.mrb[0].mxu0
    %v792 = vadd.f32 %v701, %v791
    %v793 = vpop.f32.mrb[0].mxu0
    %794 = vmatprep.mubr.f32.mxu0 0.0
    %v795 = vand.u32 %v621, 4294901760
    %796 = vmatmul.mubr.f32.gmra.mrb[0].mxu0 %v795
    %v797 = vpop.f32.mrb[0].mxu0
    %v798 = vadd.f32 %v711, %v797
    %v799 = vpop.f32.mrb[0].mxu0
    %800 = vdwg.mxu0
    %801 = vmatprep.subr.mxu0 0.0
    %v802 = vand.u32 %v623, 4294901760
    %v803 = vsub.f32 %v623, %v802
    %804 = vmatpush1.xpose.msra.mxu0 %v803
    %805 = vmatprep.subr.mxu0 0.0
    %v806 = vand.u32 %v625, 4294901760
    %v807 = vsub.f32 %v625, %v806
    %808 = vmatpush1.xpose.msra.mxu0 %v807
    %809 = vmatprep.subr.mxu0 0.0
    %810 = vmatpush1.xpose.msra.mxu0 0.0
    %811 = vmatprep.subr.mxu0 0.0
    %812 = vmatpush1.xpose.msra.mxu0 0.0
    %813 = vmatprep.subr.mxu0 0.0
    %814 = vmatpush1.xpose.msra.mxu0 0.0
    %815 = vmatprep.subr.mxu0 0.0
    %816 = vmatpush1.xpose.msra.mxu0 0.0
    %817 = vmatprep.subr.mxu0 0.0
    %818 = vmatpush1.xpose.msra.mxu0 0.0
    %819 = vmatprep.subr.mxu0 0.0
    %820 = vmatpush1.xpose.msra.mxu0 0.0
    %821 = vmatprep.subr.mxu0 0.0
    %822 = vmatpush1.xpose.msra.mxu0 0.0
    %823 = vmatprep.subr.mxu0 0.0
    %824 = vmatpush1.xpose.msra.mxu0 0.0
    %825 = vmatprep.subr.mxu0 0.0
    %826 = vmatpush1.xpose.msra.mxu0 0.0
    %827 = vmatprep.subr.mxu0 0.0
    %828 = vmatpush1.xpose.msra.mxu0 0.0
    %829 = vmatprep.subr.mxu0 0.0
    %830 = vmatpush1.xpose.msra.mxu0 0.0
    %831 = vmatprep.subr.mxu0 0.0
    %832 = vmatpush1.xpose.msra.mxu0 0.0
    %833 = vmatprep.subr.mxu0 0.0
    %834 = vmatpush1.xpose.msra.mxu0 0.0
    %835 = vmatprep.subr.mxu0 0.0
    %836 = vmatpush1.xpose.msra.mxu0 0.0
    %837 = vmatprep.subr.mxu0 0.0
    %838 = vmatpush1.xpose.msra.mxu0 0.0
    %839 = vmatprep.subr.mxu0 0.0
    %840 = vmatpush1.xpose.msra.mxu0 0.0
    %841 = vmatprep.subr.mxu0 0.0
    %842 = vmatpush1.xpose.msra.mxu0 0.0
    %843 = vmatprep.subr.mxu0 0.0
    %844 = vmatpush1.xpose.msra.mxu0 0.0
    %845 = vmatprep.subr.mxu0 0.0
    %846 = vmatpush1.xpose.msra.mxu0 0.0
    %847 = vmatprep.subr.mxu0 0.0
    %848 = vmatpush1.xpose.msra.mxu0 0.0
    %849 = vmatprep.subr.mxu0 0.0
    %850 = vmatpush1.xpose.msra.mxu0 0.0
    %851 = vmatprep.subr.mxu0 0.0
    %852 = vmatpush1.xpose.msra.mxu0 0.0
    %853 = vmatprep.subr.mxu0 0.0
    %854 = vmatpush1.xpose.msra.mxu0 0.0
    %855 = vmatprep.subr.mxu0 0.0
    %856 = vmatpush1.xpose.msra.mxu0 0.0
    %857 = vmatprep.subr.mxu0 0.0
    %858 = vmatpush1.xpose.msra.mxu0 0.0
    %859 = vmatprep.subr.mxu0 0.0
    %860 = vmatpush1.xpose.msra.mxu0 0.0
    %861 = vmatprep.subr.mxu0 0.0
    %862 = vmatpush1.xpose.msra.mxu0 0.0
    %863 = vmatprep.subr.mxu0 0.0
    %864 = vmatpush1.xpose.msra.mxu0 0.0
    %865 = vmatprep.subr.mxu0 0.0
    %866 = vmatpush1.xpose.msra.mxu0 0.0
    %867 = vmatprep.subr.mxu0 0.0
    %868 = vmatpush1.xpose.msra.mxu0 0.0
    %869 = vmatprep.mubr.f32.mxu0 0.0
    %v870 = vand.u32 %v619, 4294901760
    %v871 = vsub.f32 %v619, %v870
    %872 = vmatmul.mubr.f32.gmra.mrb[0].mxu0 %v871
    %v873 = vpop.f32.mrb[0].mxu0
    %v874 = vadd.f32 %v792, %v873
    %v875 = vpop.f32.mrb[0].mxu0
    %876 = vmatprep.mubr.f32.mxu0 0.0
    %v877 = vand.u32 %v621, 4294901760
    %v878 = vsub.f32 %v621, %v877
    %879 = vmatmul.mubr.f32.gmra.mrb[0].mxu0 %v878
    %v880 = vpop.f32.mrb[0].mxu0
    %v881 = vadd.f32 %v798, %v880
    %v882 = vpop.f32.mrb[0].mxu0
    %883 = vdwg.mxu0
    %884 = vmatprep.subr.mxu0 0.0
    %v885 = vand.u32 %v623, 4294901760
    %886 = vmatpush1.xpose.msra.mxu0 %v885
    %887 = vmatprep.subr.mxu0 0.0
    %v888 = vand.u32 %v625, 4294901760
    %889 = vmatpush1.xpose.msra.mxu0 %v888
    %890 = vmatprep.subr.mxu0 0.0
    %891 = vmatpush1.xpose.msra.mxu0 0.0
    %892 = vmatprep.subr.mxu0 0.0
    %893 = vmatpush1.xpose.msra.mxu0 0.0
    %894 = vmatprep.subr.mxu0 0.0
    %895 = vmatpush1.xpose.msra.mxu0 0.0
    %896 = vmatprep.subr.mxu0 0.0
    %897 = vmatpush1.xpose.msra.mxu0 0.0
    %898 = vmatprep.subr.mxu0 0.0
    %899 = vmatpush1.xpose.msra.mxu0 0.0
    %900 = vmatprep.subr.mxu0 0.0
    %901 = vmatpush1.xpose.msra.mxu0 0.0
    %902 = vmatprep.subr.mxu0 0.0
    %903 = vmatpush1.xpose.msra.mxu0 0.0
    %904 = vmatprep.subr.mxu0 0.0
    %905 = vmatpush1.xpose.msra.mxu0 0.0
    %906 = vmatprep.subr.mxu0 0.0
    %907 = vmatpush1.xpose.msra.mxu0 0.0
    %908 = vmatprep.subr.mxu0 0.0
    %909 = vmatpush1.xpose.msra.mxu0 0.0
    %910 = vmatprep.subr.mxu0 0.0
    %911 = vmatpush1.xpose.msra.mxu0 0.0
    %912 = vmatprep.subr.mxu0 0.0
    %913 = vmatpush1.xpose.msra.mxu0 0.0
    %914 = vmatprep.subr.mxu0 0.0
    %915 = vmatpush1.xpose.msra.mxu0 0.0
    %916 = vmatprep.subr.mxu0 0.0
    %917 = vmatpush1.xpose.msra.mxu0 0.0
    %918 = vmatprep.subr.mxu0 0.0
    %919 = vmatpush1.xpose.msra.mxu0 0.0
    %920 = vmatprep.subr.mxu0 0.0
    %921 = vmatpush1.xpose.msra.mxu0 0.0
    %922 = vmatprep.subr.mxu0 0.0
    %923 = vmatpush1.xpose.msra.mxu0 0.0
    %924 = vmatprep.subr.mxu0 0.0
    %925 = vmatpush1.xpose.msra.mxu0 0.0
    %926 = vmatprep.subr.mxu0 0.0
    %927 = vmatpush1.xpose.msra.mxu0 0.0
    %928 = vmatprep.subr.mxu0 0.0
    %929 = vmatpush1.xpose.msra.mxu0 0.0
    %930 = vmatprep.subr.mxu0 0.0
    %931 = vmatpush1.xpose.msra.mxu0 0.0
    %932 = vmatprep.subr.mxu0 0.0
    %933 = vmatpush1.xpose.msra.mxu0 0.0
    %934 = vmatprep.subr.mxu0 0.0
    %935 = vmatpush1.xpose.msra.mxu0 0.0
    %936 = vmatprep.subr.mxu0 0.0
    %937 = vmatpush1.xpose.msra.mxu0 0.0
    %938 = vmatprep.subr.mxu0 0.0
    %939 = vmatpush1.xpose.msra.mxu0 0.0
    %940 = vmatprep.subr.mxu0 0.0
    %941 = vmatpush1.xpose.msra.mxu0 0.0
    %942 = vmatprep.subr.mxu0 0.0
    %943 = vmatpush1.xpose.msra.mxu0 0.0
    %944 = vmatprep.subr.mxu0 0.0
    %945 = vmatpush1.xpose.msra.mxu0 0.0
    %946 = vmatprep.subr.mxu0 0.0
    %947 = vmatpush1.xpose.msra.mxu0 0.0
    %948 = vmatprep.subr.mxu0 0.0
    %949 = vmatpush1.xpose.msra.mxu0 0.0
    %950 = vmatprep.mubr.f32.mxu0 0.0
    %v951 = vand.u32 %v619, 4294901760
    %v952 = vsub.f32 %v619, %v951
    %v953 = vand.u32 %v952, 4294901760
    %954 = vmatmul.mubr.f32.gmra.mrb[0].mxu0 %v953
    %v955 = vpop.f32.mrb[0].mxu0
    %v956 = vadd.f32 %v874, %v955
    %v957 = vpop.f32.mrb[0].mxu0
    %958 = vmatprep.mubr.f32.mxu0 0.0
    %v959 = vand.u32 %v621, 4294901760
    %v960 = vsub.f32 %v621, %v959
    %v961 = vand.u32 %v960, 4294901760
    %962 = vmatmul.mubr.f32.gmra.mrb[0].mxu0 %v961
    %v963 = vpop.f32.mrb[0].mxu0
    %v964 = vadd.f32 %v881, %v963
    %v965 = vpop.f32.mrb[0].mxu0
    %966 = vdwg.mxu0
    %967 = vmatprep.subr.mxu0 0.0
    %v968 = vand.u32 %v623, 4294901760
    %v969 = vsub.f32 %v623, %v968
    %v970 = vand.u32 %v969, 4294901760
    %971 = vmatpush1.xpose.msra.mxu0 %v970
    %972 = vmatprep.subr.mxu0 0.0
    %v973 = vand.u32 %v625, 4294901760
    %v974 = vsub.f32 %v625, %v973
    %v975 = vand.u32 %v974, 4294901760
    %976 = vmatpush1.xpose.msra.mxu0 %v975
    %977 = vmatprep.subr.mxu0 0.0
    %978 = vmatpush1.xpose.msra.mxu0 0.0
    %979 = vmatprep.subr.mxu0 0.0
    %980 = vmatpush1.xpose.msra.mxu0 0.0
    %981 = vmatprep.subr.mxu0 0.0
    %982 = vmatpush1.xpose.msra.mxu0 0.0
    %983 = vmatprep.subr.mxu0 0.0
    %984 = vmatpush1.xpose.msra.mxu0 0.0
    %985 = vmatprep.subr.mxu0 0.0
    %986 = vmatpush1.xpose.msra.mxu0 0.0
    %987 = vmatprep.subr.mxu0 0.0
    %988 = vmatpush1.xpose.msra.mxu0 0.0
    %989 = vmatprep.subr.mxu0 0.0
    %990 = vmatpush1.xpose.msra.mxu0 0.0
    %991 = vmatprep.subr.mxu0 0.0
    %992 = vmatpush1.xpose.msra.mxu0 0.0
    %993 = vmatprep.subr.mxu0 0.0
    %994 = vmatpush1.xpose.msra.mxu0 0.0
    %995 = vmatprep.subr.mxu0 0.0
    %996 = vmatpush1.xpose.msra.mxu0 0.0
    %997 = vmatprep.subr.mxu0 0.0
    %998 = vmatpush1.xpose.msra.mxu0 0.0
    %999 = vmatprep.subr.mxu0 0.0
    %1000 = vmatpush1.xpose.msra.mxu0 0.0
    %1001 = vmatprep.subr.mxu0 0.0
    %1002 = vmatpush1.xpose.msra.mxu0 0.0
    %1003 = vmatprep.subr.mxu0 0.0
    %1004 = vmatpush1.xpose.msra.mxu0 0.0
    %1005 = vmatprep.subr.mxu0 0.0
    %1006 = vmatpush1.xpose.msra.mxu0 0.0
    %1007 = vmatprep.subr.mxu0 0.0
    %1008 = vmatpush1.xpose.msra.mxu0 0.0
    %1009 = vmatprep.subr.mxu0 0.0
    %1010 = vmatpush1.xpose.msra.mxu0 0.0
    %1011 = vmatprep.subr.mxu0 0.0
    %1012 = vmatpush1.xpose.msra.mxu0 0.0
    %1013 = vmatprep.subr.mxu0 0.0
    %1014 = vmatpush1.xpose.msra.mxu0 0.0
    %1015 = vmatprep.subr.mxu0 0.0
    %1016 = vmatpush1.xpose.msra.mxu0 0.0
    %1017 = vmatprep.subr.mxu0 0.0
    %1018 = vmatpush1.xpose.msra.mxu0 0.0
    %1019 = vmatprep.subr.mxu0 0.0
    %1020 = vmatpush1.xpose.msra.mxu0 0.0
    %1021 = vmatprep.subr.mxu0 0.0
    %1022 = vmatpush1.xpose.msra.mxu0 0.0
    %1023 = vmatprep.subr.mxu0 0.0
    %1024 = vmatpush1.xpose.msra.mxu0 0.0
    %1025 = vmatprep.subr.mxu0 0.0
    %1026 = vmatpush1.xpose.msra.mxu0 0.0
    %1027 = vmatprep.subr.mxu0 0.0
    %1028 = vmatpush1.xpose.msra.mxu0 0.0
    %1029 = vmatprep.subr.mxu0 0.0
    %1030 = vmatpush1.xpose.msra.mxu0 0.0
    %1031 = vmatprep.subr.mxu0 0.0
    %1032 = vmatpush1.xpose.msra.mxu0 0.0
    %1033 = vmatprep.subr.mxu0 0.0
    %1034 = vmatpush1.xpose.msra.mxu0 0.0
    %1035 = vmatprep.subr.mxu0 0.0
    %1036 = vmatpush1.xpose.msra.mxu0 0.0
    %1037 = vmatprep.mubr.f32.mxu0 0.0
    %v1038 = vand.u32 %v619, 4294901760
    %1039 = vmatmul.mubr.f32.gmra.mrb[0].mxu0 %v1038
    %v1040 = vpop.f32.mrb[0].mxu0
    %v1041 = vadd.f32 %v956, %v1040
    %v1042 = vpop.f32.mrb[0].mxu0
    %1043 = vmatprep.mubr.f32.mxu0 0.0
    %v1044 = vand.u32 %v621, 4294901760
    %1045 = vmatmul.mubr.f32.gmra.mrb[0].mxu0 %v1044
    %v1046 = vpop.f32.mrb[0].mxu0
    %v1047 = vadd.f32 %v964, %v1046
    %v1048 = vpop.f32.mrb[0].mxu0
    %1049 = vdwg.mxu0
    %1050 = vmatprep.subr.mxu0 0.0
    %v1051 = vand.u32 %v623, 4294901760
    %1052 = vmatpush1.xpose.msra.mxu0 %v1051
    %1053 = vmatprep.subr.mxu0 0.0
    %v1054 = vand.u32 %v625, 4294901760
    %1055 = vmatpush1.xpose.msra.mxu0 %v1054
    %1056 = vmatprep.subr.mxu0 0.0
    %1057 = vmatpush1.xpose.msra.mxu0 0.0
    %1058 = vmatprep.subr.mxu0 0.0
    %1059 = vmatpush1.xpose.msra.mxu0 0.0
    %1060 = vmatprep.subr.mxu0 0.0
    %1061 = vmatpush1.xpose.msra.mxu0 0.0
    %1062 = vmatprep.subr.mxu0 0.0
    %1063 = vmatpush1.xpose.msra.mxu0 0.0
    %1064 = vmatprep.subr.mxu0 0.0
    %1065 = vmatpush1.xpose.msra.mxu0 0.0
    %1066 = vmatprep.subr.mxu0 0.0
    %1067 = vmatpush1.xpose.msra.mxu0 0.0
    %1068 = vmatprep.subr.mxu0 0.0
    %1069 = vmatpush1.xpose.msra.mxu0 0.0
    %1070 = vmatprep.subr.mxu0 0.0
    %1071 = vmatpush1.xpose.msra.mxu0 0.0
    %1072 = vmatprep.subr.mxu0 0.0
    %1073 = vmatpush1.xpose.msra.mxu0 0.0
    %1074 = vmatprep.subr.mxu0 0.0
    %1075 = vmatpush1.xpose.msra.mxu0 0.0
    %1076 = vmatprep.subr.mxu0 0.0
    %1077 = vmatpush1.xpose.msra.mxu0 0.0
    %1078 = vmatprep.subr.mxu0 0.0
    %1079 = vmatpush1.xpose.msra.mxu0 0.0
    %1080 = vmatprep.subr.mxu0 0.0
    %1081 = vmatpush1.xpose.msra.mxu0 0.0
    %1082 = vmatprep.subr.mxu0 0.0
    %1083 = vmatpush1.xpose.msra.mxu0 0.0
    %1084 = vmatprep.subr.mxu0 0.0
    %1085 = vmatpush1.xpose.msra.mxu0 0.0
    %1086 = vmatprep.subr.mxu0 0.0
    %1087 = vmatpush1.xpose.msra.mxu0 0.0
    %1088 = vmatprep.subr.mxu0 0.0
    %1089 = vmatpush1.xpose.msra.mxu0 0.0
    %1090 = vmatprep.subr.mxu0 0.0
    %1091 = vmatpush1.xpose.msra.mxu0 0.0
    %1092 = vmatprep.subr.mxu0 0.0
    %1093 = vmatpush1.xpose.msra.mxu0 0.0
    %1094 = vmatprep.subr.mxu0 0.0
    %1095 = vmatpush1.xpose.msra.mxu0 0.0
    %1096 = vmatprep.subr.mxu0 0.0
    %1097 = vmatpush1.xpose.msra.mxu0 0.0
    %1098 = vmatprep.subr.mxu0 0.0
    %1099 = vmatpush1.xpose.msra.mxu0 0.0
    %1100 = vmatprep.subr.mxu0 0.0
    %1101 = vmatpush1.xpose.msra.mxu0 0.0
    %1102 = vmatprep.subr.mxu0 0.0
    %1103 = vmatpush1.xpose.msra.mxu0 0.0
    %1104 = vmatprep.subr.mxu0 0.0
    %1105 = vmatpush1.xpose.msra.mxu0 0.0
    %1106 = vmatprep.subr.mxu0 0.0
    %1107 = vmatpush1.xpose.msra.mxu0 0.0
    %1108 = vmatprep.subr.mxu0 0.0
    %1109 = vmatpush1.xpose.msra.mxu0 0.0
    %1110 = vmatprep.subr.mxu0 0.0
    %1111 = vmatpush1.xpose.msra.mxu0 0.0
    %1112 = vmatprep.subr.mxu0 0.0
    %1113 = vmatpush1.xpose.msra.mxu0 0.0
    %1114 = vmatprep.subr.mxu0 0.0
    %1115 = vmatpush1.xpose.msra.mxu0 0.0
    %1116 = vmatprep.mubr.f32.mxu0 0.0
    %v1117 = vand.u32 %v619, 4294901760
    %1118 = vmatmul.mubr.f32.gmra.mrb[0].mxu0 %v1117
    %v1119 = vpop.f32.mrb[0].mxu0
    %v1120 = vadd.f32 %v1041, %v1119
    %v1121 = vpop.f32.mrb[0].mxu0
    %1122 = vmatprep.mubr.f32.mxu0 0.0
    %v1123 = vand.u32 %v621, 4294901760
    %1124 = vmatmul.mubr.f32.gmra.mrb[0].mxu0 %v1123
    %v1125 = vpop.f32.mrb[0].mxu0
    %v1126 = vadd.f32 %v1047, %v1125
    %v1127 = vpop.f32.mrb[0].mxu0
    %1128 = vdwg.mxu0
    %v1129 = vmul.f32 %v1120, 0.25
    %v1130 = vmul.f32 %v1126, 0.25
    %v1131 = vld [vmem:[%s2] sm:$0xff]
    %v1132 = vld [vmem:[%s2 + $0x8] sm:$0xff]
    %vm1133 = vcmp.ne.f32.partialorder %v1131, 0.0
    %vm1134 = vcmp.ne.f32.partialorder %v1132, 0.0
    %v1135 = vsel %vm1133, %v1129, -1e+30
    %v1136 = vsel %vm1134, %v1130, -1e+30
    %v1137 = vsel %vm618, %v1135, -inf
    %1138 = vmax.xlane.f32.xlu0 %v1137
    %v1139 = vpop.xlane.xlu0 %1138
    %v1140 = vsel %vm618, %v1136, -inf
    %1141 = vmax.xlane.f32.xlu0 %v1140
    %v1142 = vpop.xlane.xlu0 %1141
    %v1143 = vsub.f32 %v1135, %v1139
    %v1144 = vsub.f32 %v1136, %v1142
    %v1145 = vmul.f32 %v1143, 1.442695
    %v1146 = vpow.pop %v1145
    %v1147 = vmul.f32 %v1144, 1.442695
    %v1148 = vpow.pop %v1147
    %v1149 = vsel %vm618, %v1146, 0.0
    %1150 = vadd.xlane.f32.xlu0 %v1149
    %v1151 = vpop.xlane.xlu0 %1150
    %v1152 = vsel %vm618, %v1148, 0.0
    %1153 = vadd.xlane.f32.xlu0 %v1152
    %v1154 = vpop.xlane.xlu0 %1153
    %v1155 = vrcp.pop %v1151
    %v1156 = vmul.f32 %v1146, %v1155
    %v1157 = vrcp.pop %v1154
    %v1158 = vmul.f32 %v1148, %v1157
    %1159 = vrot.lane.b32.xlu0 %v603, 96
    %v1160 = vpop.permute.xlu0 %1159
    %1161 = vrot.lane.b32.xlu0 %v609, 96
    %v1162 = vpop.permute.xlu0 %1161
    %v1166 = vsel %vm618, %v1156, 0
    %v1169 = vsel %vm618, %v1158, 0
    %1171 = vmatprep.subr.mxu0 0.0
    %v1172 = vand.u32 %v1160, 4294901760
    %1173 = vmatpush1.msra.mxu0 %v1172
    %1174 = vmatprep.subr.mxu0 0.0
    %v1175 = vand.u32 %v1162, 4294901760
    %1176 = vmatpush1.msra.mxu0 %v1175
    %1177 = vmatprep.subr.mxu0 0.0
    %1178 = vmatpush1.msra.mxu0 0.0
    %1179 = vmatprep.subr.mxu0 0.0
    %1180 = vmatpush1.msra.mxu0 0.0
    %1181 = vmatprep.subr.mxu0 0.0
    %1182 = vmatpush1.msra.mxu0 0.0
    %1183 = vmatprep.subr.mxu0 0.0
    %1184 = vmatpush1.msra.mxu0 0.0
    %1185 = vmatprep.subr.mxu0 0.0
    %1186 = vmatpush1.msra.mxu0 0.0
    %1187 = vmatprep.subr.mxu0 0.0
    %1188 = vmatpush1.msra.mxu0 0.0
    %1189 = vmatprep.subr.mxu0 0.0
    %1190 = vmatpush1.msra.mxu0 0.0
    %1191 = vmatprep.subr.mxu0 0.0
    %1192 = vmatpush1.msra.mxu0 0.0
    %1193 = vmatprep.subr.mxu0 0.0
    %1194 = vmatpush1.msra.mxu0 0.0
    %1195 = vmatprep.subr.mxu0 0.0
    %1196 = vmatpush1.msra.mxu0 0.0
    %1197 = vmatprep.subr.mxu0 0.0
    %1198 = vmatpush1.msra.mxu0 0.0
    %1199 = vmatprep.subr.mxu0 0.0
    %1200 = vmatpush1.msra.mxu0 0.0
    %1201 = vmatprep.subr.mxu0 0.0
    %1202 = vmatpush1.msra.mxu0 0.0
    %1203 = vmatprep.subr.mxu0 0.0
    %1204 = vmatpush1.msra.mxu0 0.0
    %1205 = vmatprep.subr.mxu0 0.0
    %1206 = vmatpush1.msra.mxu0 0.0
    %1207 = vmatprep.subr.mxu0 0.0
    %1208 = vmatpush1.msra.mxu0 0.0
    %1209 = vmatprep.subr.mxu0 0.0
    %1210 = vmatpush1.msra.mxu0 0.0
    %1211 = vmatprep.subr.mxu0 0.0
    %1212 = vmatpush1.msra.mxu0 0.0
    %1213 = vmatprep.subr.mxu0 0.0
    %1214 = vmatpush1.msra.mxu0 0.0
    %1215 = vmatprep.subr.mxu0 0.0
    %1216 = vmatpush1.msra.mxu0 0.0
    %1217 = vmatprep.subr.mxu0 0.0
    %1218 = vmatpush1.msra.mxu0 0.0
    %1219 = vmatprep.subr.mxu0 0.0
    %1220 = vmatpush1.msra.mxu0 0.0
    %1221 = vmatprep.subr.mxu0 0.0
    %1222 = vmatpush1.msra.mxu0 0.0
    %1223 = vmatprep.subr.mxu0 0.0
    %1224 = vmatpush1.msra.mxu0 0.0
    %1225 = vmatprep.subr.mxu0 0.0
    %1226 = vmatpush1.msra.mxu0 0.0
    %1227 = vmatprep.subr.mxu0 0.0
    %1228 = vmatpush1.msra.mxu0 0.0
    %1229 = vmatprep.subr.mxu0 0.0
    %1230 = vmatpush1.msra.mxu0 0.0
    %1231 = vmatprep.subr.mxu0 0.0
    %1232 = vmatpush1.msra.mxu0 0.0
    %1233 = vmatprep.subr.mxu0 0.0
    %1234 = vmatpush1.msra.mxu0 0.0
    %1235 = vmatprep.subr.mxu0 0.0
    %1236 = vmatpush1.msra.mxu0 0.0
    %1237 = vmatprep.mubr.f32.mxu0 0.0
    %v1238 = vand.u32 %v1166, 4294901760
    %v1239 = vsub.f32 %v1166, %v1238
    %v1240 = vand.u32 %v1239, 4294901760
    %v1241 = vsub.f32 %v1239, %v1240
    %v1242 = vand.u32 %v1241, 4294901760
    %1243 = vmatmul.mubr.f32.gmra.mrb[0].mxu0 %v1242
    %v1244 = vpop.f32.mrb[0].mxu0
    %v1245 = vadd.f32 0.0, %v1244
    %v1246 = vpop.f32.mrb[0].mxu0
    %1247 = vmatprep.mubr.f32.mxu0 0.0
    %v1248 = vand.u32 %v1169, 4294901760
    %v1249 = vsub.f32 %v1169, %v1248
    %v1250 = vand.u32 %v1249, 4294901760
    %v1251 = vsub.f32 %v1249, %v1250
    %v1252 = vand.u32 %v1251, 4294901760
    %1253 = vmatmul.mubr.f32.gmra.mrb[0].mxu0 %v1252
    %v1254 = vpop.f32.mrb[0].mxu0
    %v1255 = vadd.f32 0.0, %v1254
    %v1256 = vpop.f32.mrb[0].mxu0
    %1257 = vdwg.mxu0
    %1258 = vmatprep.subr.mxu0 0.0
    %v1259 = vand.u32 %v1160, 4294901760
    %v1260 = vsub.f32 %v1160, %v1259
    %v1261 = vand.u32 %v1260, 4294901760
    %v1262 = vsub.f32 %v1260, %v1261
    %v1263 = vand.u32 %v1262, 4294901760
    %1264 = vmatpush1.msra.mxu0 %v1263
    %1265 = vmatprep.subr.mxu0 0.0
    %v1266 = vand.u32 %v1162, 4294901760
    %v1267 = vsub.f32 %v1162, %v1266
    %v1268 = vand.u32 %v1267, 4294901760
    %v1269 = vsub.f32 %v1267, %v1268
    %v1270 = vand.u32 %v1269, 4294901760
    %1271 = vmatpush1.msra.mxu0 %v1270
    %1272 = vmatprep.subr.mxu0 0.0
    %1273 = vmatpush1.msra.mxu0 0.0
    %1274 = vmatprep.subr.mxu0 0.0
    %1275 = vmatpush1.msra.mxu0 0.0
    %1276 = vmatprep.subr.mxu0 0.0
    %1277 = vmatpush1.msra.mxu0 0.0
    %1278 = vmatprep.subr.mxu0 0.0
    %1279 = vmatpush1.msra.mxu0 0.0
    %1280 = vmatprep.subr.mxu0 0.0
    %1281 = vmatpush1.msra.mxu0 0.0
    %1282 = vmatprep.subr.mxu0 0.0
    %1283 = vmatpush1.msra.mxu0 0.0
    %1284 = vmatprep.subr.mxu0 0.0
    %1285 = vmatpush1.msra.mxu0 0.0
    %1286 = vmatprep.subr.mxu0 0.0
    %1287 = vmatpush1.msra.mxu0 0.0
    %1288 = vmatprep.subr.mxu0 0.0
    %1289 = vmatpush1.msra.mxu0 0.0
    %1290 = vmatprep.subr.mxu0 0.0
    %1291 = vmatpush1.msra.mxu0 0.0
    %1292 = vmatprep.subr.mxu0 0.0
    %1293 = vmatpush1.msra.mxu0 0.0
    %1294 = vmatprep.subr.mxu0 0.0
    %1295 = vmatpush1.msra.mxu0 0.0
    %1296 = vmatprep.subr.mxu0 0.0
    %1297 = vmatpush1.msra.mxu0 0.0
    %1298 = vmatprep.subr.mxu0 0.0
    %1299 = vmatpush1.msra.mxu0 0.0
    %1300 = vmatprep.subr.mxu0 0.0
    %1301 = vmatpush1.msra.mxu0 0.0
    %1302 = vmatprep.subr.mxu0 0.0
    %1303 = vmatpush1.msra.mxu0 0.0
    %1304 = vmatprep.subr.mxu0 0.0
    %1305 = vmatpush1.msra.mxu0 0.0
    %1306 = vmatprep.subr.mxu0 0.0
    %1307 = vmatpush1.msra.mxu0 0.0
    %1308 = vmatprep.subr.mxu0 0.0
    %1309 = vmatpush1.msra.mxu0 0.0
    %1310 = vmatprep.subr.mxu0 0.0
    %1311 = vmatpush1.msra.mxu0 0.0
    %1312 = vmatprep.subr.mxu0 0.0
    %1313 = vmatpush1.msra.mxu0 0.0
    %1314 = vmatprep.subr.mxu0 0.0
    %1315 = vmatpush1.msra.mxu0 0.0
    %1316 = vmatprep.subr.mxu0 0.0
    %1317 = vmatpush1.msra.mxu0 0.0
    %1318 = vmatprep.subr.mxu0 0.0
    %1319 = vmatpush1.msra.mxu0 0.0
    %1320 = vmatprep.subr.mxu0 0.0
    %1321 = vmatpush1.msra.mxu0 0.0
    %1322 = vmatprep.subr.mxu0 0.0
    %1323 = vmatpush1.msra.mxu0 0.0
    %1324 = vmatprep.subr.mxu0 0.0
    %1325 = vmatpush1.msra.mxu0 0.0
    %1326 = vmatprep.subr.mxu0 0.0
    %1327 = vmatpush1.msra.mxu0 0.0
    %1328 = vmatprep.subr.mxu0 0.0
    %1329 = vmatpush1.msra.mxu0 0.0
    %1330 = vmatprep.subr.mxu0 0.0
    %1331 = vmatpush1.msra.mxu0 0.0
    %1332 = vmatprep.mubr.f32.mxu0 0.0
    %v1333 = vand.u32 %v1166, 4294901760
    %1334 = vmatmul.mubr.f32.gmra.mrb[0].mxu0 %v1333
    %v1335 = vpop.f32.mrb[0].mxu0
    %v1336 = vadd.f32 %v1245, %v1335
    %v1337 = vpop.f32.mrb[0].mxu0
    %1338 = vmatprep.mubr.f32.mxu0 0.0
    %v1339 = vand.u32 %v1169, 4294901760
    %1340 = vmatmul.mubr.f32.gmra.mrb[0].mxu0 %v1339
    %v1341 = vpop.f32.mrb[0].mxu0
    %v1342 = vadd.f32 %v1255, %v1341
    %v1343 = vpop.f32.mrb[0].mxu0
    %1344 = vdwg.mxu0
    %1345 = vmatprep.subr.mxu0 0.0
    %v1346 = vand.u32 %v1160, 4294901760
    %v1347 = vsub.f32 %v1160, %v1346
    %1348 = vmatpush1.msra.mxu0 %v1347
    %1349 = vmatprep.subr.mxu0 0.0
    %v1350 = vand.u32 %v1162, 4294901760
    %v1351 = vsub.f32 %v1162, %v1350
    %1352 = vmatpush1.msra.mxu0 %v1351
    %1353 = vmatprep.subr.mxu0 0.0
    %1354 = vmatpush1.msra.mxu0 0.0
    %1355 = vmatprep.subr.mxu0 0.0
    %1356 = vmatpush1.msra.mxu0 0.0
    %1357 = vmatprep.subr.mxu0 0.0
    %1358 = vmatpush1.msra.mxu0 0.0
    %1359 = vmatprep.subr.mxu0 0.0
    %1360 = vmatpush1.msra.mxu0 0.0
    %1361 = vmatprep.subr.mxu0 0.0
    %1362 = vmatpush1.msra.mxu0 0.0
    %1363 = vmatprep.subr.mxu0 0.0
    %1364 = vmatpush1.msra.mxu0 0.0
    %1365 = vmatprep.subr.mxu0 0.0
    %1366 = vmatpush1.msra.mxu0 0.0
    %1367 = vmatprep.subr.mxu0 0.0
    %1368 = vmatpush1.msra.mxu0 0.0
    %1369 = vmatprep.subr.mxu0 0.0
    %1370 = vmatpush1.msra.mxu0 0.0
    %1371 = vmatprep.subr.mxu0 0.0
    %1372 = vmatpush1.msra.mxu0 0.0
    %1373 = vmatprep.subr.mxu0 0.0
    %1374 = vmatpush1.msra.mxu0 0.0
    %1375 = vmatprep.subr.mxu0 0.0
    %1376 = vmatpush1.msra.mxu0 0.0
    %1377 = vmatprep.subr.mxu0 0.0
    %1378 = vmatpush1.msra.mxu0 0.0
    %1379 = vmatprep.subr.mxu0 0.0
    %1380 = vmatpush1.msra.mxu0 0.0
    %1381 = vmatprep.subr.mxu0 0.0
    %1382 = vmatpush1.msra.mxu0 0.0
    %1383 = vmatprep.subr.mxu0 0.0
    %1384 = vmatpush1.msra.mxu0 0.0
    %1385 = vmatprep.subr.mxu0 0.0
    %1386 = vmatpush1.msra.mxu0 0.0
    %1387 = vmatprep.subr.mxu0 0.0
    %1388 = vmatpush1.msra.mxu0 0.0
    %1389 = vmatprep.subr.mxu0 0.0
    %1390 = vmatpush1.msra.mxu0 0.0
    %1391 = vmatprep.subr.mxu0 0.0
    %1392 = vmatpush1.msra.mxu0 0.0
    %1393 = vmatprep.subr.mxu0 0.0
    %1394 = vmatpush1.msra.mxu0 0.0
    %1395 = vmatprep.subr.mxu0 0.0
    %1396 = vmatpush1.msra.mxu0 0.0
    %1397 = vmatprep.subr.mxu0 0.0
    %1398 = vmatpush1.msra.mxu0 0.0
    %1399 = vmatprep.subr.mxu0 0.0
    %1400 = vmatpush1.msra.mxu0 0.0
    %1401 = vmatprep.subr.mxu0 0.0
    %1402 = vmatpush1.msra.mxu0 0.0
    %1403 = vmatprep.subr.mxu0 0.0
    %1404 = vmatpush1.msra.mxu0 0.0
    %1405 = vmatprep.subr.mxu0 0.0
    %1406 = vmatpush1.msra.mxu0 0.0
    %1407 = vmatprep.subr.mxu0 0.0
    %1408 = vmatpush1.msra.mxu0 0.0
    %1409 = vmatprep.subr.mxu0 0.0
    %1410 = vmatpush1.msra.mxu0 0.0
    %1411 = vmatprep.subr.mxu0 0.0
    %1412 = vmatpush1.msra.mxu0 0.0
    %1413 = vmatprep.mubr.f32.mxu0 0.0
    %v1414 = vand.u32 %v1166, 4294901760
    %v1415 = vsub.f32 %v1166, %v1414
    %1416 = vmatmul.mubr.f32.gmra.mrb[0].mxu0 %v1415
    %v1417 = vpop.f32.mrb[0].mxu0
    %v1418 = vadd.f32 %v1336, %v1417
    %v1419 = vpop.f32.mrb[0].mxu0
    %1420 = vmatprep.mubr.f32.mxu0 0.0
    %v1421 = vand.u32 %v1169, 4294901760
    %v1422 = vsub.f32 %v1169, %v1421
    %1423 = vmatmul.mubr.f32.gmra.mrb[0].mxu0 %v1422
    %v1424 = vpop.f32.mrb[0].mxu0
    %v1425 = vadd.f32 %v1342, %v1424
    %v1426 = vpop.f32.mrb[0].mxu0
    %1427 = vdwg.mxu0
    %1428 = vmatprep.subr.mxu0 0.0
    %v1429 = vand.u32 %v1160, 4294901760
    %1430 = vmatpush1.msra.mxu0 %v1429
    %1431 = vmatprep.subr.mxu0 0.0
    %v1432 = vand.u32 %v1162, 4294901760
    %1433 = vmatpush1.msra.mxu0 %v1432
    %1434 = vmatprep.subr.mxu0 0.0
    %1435 = vmatpush1.msra.mxu0 0.0
    %1436 = vmatprep.subr.mxu0 0.0
    %1437 = vmatpush1.msra.mxu0 0.0
    %1438 = vmatprep.subr.mxu0 0.0
    %1439 = vmatpush1.msra.mxu0 0.0
    %1440 = vmatprep.subr.mxu0 0.0
    %1441 = vmatpush1.msra.mxu0 0.0
    %1442 = vmatprep.subr.mxu0 0.0
    %1443 = vmatpush1.msra.mxu0 0.0
    %1444 = vmatprep.subr.mxu0 0.0
    %1445 = vmatpush1.msra.mxu0 0.0
    %1446 = vmatprep.subr.mxu0 0.0
    %1447 = vmatpush1.msra.mxu0 0.0
    %1448 = vmatprep.subr.mxu0 0.0
    %1449 = vmatpush1.msra.mxu0 0.0
    %1450 = vmatprep.subr.mxu0 0.0
    %1451 = vmatpush1.msra.mxu0 0.0
    %1452 = vmatprep.subr.mxu0 0.0
    %1453 = vmatpush1.msra.mxu0 0.0
    %1454 = vmatprep.subr.mxu0 0.0
    %1455 = vmatpush1.msra.mxu0 0.0
    %1456 = vmatprep.subr.mxu0 0.0
    %1457 = vmatpush1.msra.mxu0 0.0
    %1458 = vmatprep.subr.mxu0 0.0
    %1459 = vmatpush1.msra.mxu0 0.0
    %1460 = vmatprep.subr.mxu0 0.0
    %1461 = vmatpush1.msra.mxu0 0.0
    %1462 = vmatprep.subr.mxu0 0.0
    %1463 = vmatpush1.msra.mxu0 0.0
    %1464 = vmatprep.subr.mxu0 0.0
    %1465 = vmatpush1.msra.mxu0 0.0
    %1466 = vmatprep.subr.mxu0 0.0
    %1467 = vmatpush1.msra.mxu0 0.0
    %1468 = vmatprep.subr.mxu0 0.0
    %1469 = vmatpush1.msra.mxu0 0.0
    %1470 = vmatprep.subr.mxu0 0.0
    %1471 = vmatpush1.msra.mxu0 0.0
    %1472 = vmatprep.subr.mxu0 0.0
    %1473 = vmatpush1.msra.mxu0 0.0
    %1474 = vmatprep.subr.mxu0 0.0
    %1475 = vmatpush1.msra.mxu0 0.0
    %1476 = vmatprep.subr.mxu0 0.0
    %1477 = vmatpush1.msra.mxu0 0.0
    %1478 = vmatprep.subr.mxu0 0.0
    %1479 = vmatpush1.msra.mxu0 0.0
    %1480 = vmatprep.subr.mxu0 0.0
    %1481 = vmatpush1.msra.mxu0 0.0
    %1482 = vmatprep.subr.mxu0 0.0
    %1483 = vmatpush1.msra.mxu0 0.0
    %1484 = vmatprep.subr.mxu0 0.0
    %1485 = vmatpush1.msra.mxu0 0.0
    %1486 = vmatprep.subr.mxu0 0.0
    %1487 = vmatpush1.msra.mxu0 0.0
    %1488 = vmatprep.subr.mxu0 0.0
    %1489 = vmatpush1.msra.mxu0 0.0
    %1490 = vmatprep.subr.mxu0 0.0
    %1491 = vmatpush1.msra.mxu0 0.0
    %1492 = vmatprep.subr.mxu0 0.0
    %1493 = vmatpush1.msra.mxu0 0.0
    %1494 = vmatprep.mubr.f32.mxu0 0.0
    %v1495 = vand.u32 %v1166, 4294901760
    %v1496 = vsub.f32 %v1166, %v1495
    %v1497 = vand.u32 %v1496, 4294901760
    %1498 = vmatmul.mubr.f32.gmra.mrb[0].mxu0 %v1497
    %v1499 = vpop.f32.mrb[0].mxu0
    %v1500 = vadd.f32 %v1418, %v1499
    %v1501 = vpop.f32.mrb[0].mxu0
    %1502 = vmatprep.mubr.f32.mxu0 0.0
    %v1503 = vand.u32 %v1169, 4294901760
    %v1504 = vsub.f32 %v1169, %v1503
    %v1505 = vand.u32 %v1504, 4294901760
    %1506 = vmatmul.mubr.f32.gmra.mrb[0].mxu0 %v1505
    %v1507 = vpop.f32.mrb[0].mxu0
    %v1508 = vadd.f32 %v1425, %v1507
    %v1509 = vpop.f32.mrb[0].mxu0
    %1510 = vdwg.mxu0
    %1511 = vmatprep.subr.mxu0 0.0
    %v1512 = vand.u32 %v1160, 4294901760
    %v1513 = vsub.f32 %v1160, %v1512
    %v1514 = vand.u32 %v1513, 4294901760
    %1515 = vmatpush1.msra.mxu0 %v1514
    %1516 = vmatprep.subr.mxu0 0.0
    %v1517 = vand.u32 %v1162, 4294901760
    %v1518 = vsub.f32 %v1162, %v1517
    %v1519 = vand.u32 %v1518, 4294901760
    %1520 = vmatpush1.msra.mxu0 %v1519
    %1521 = vmatprep.subr.mxu0 0.0
    %1522 = vmatpush1.msra.mxu0 0.0
    %1523 = vmatprep.subr.mxu0 0.0
    %1524 = vmatpush1.msra.mxu0 0.0
    %1525 = vmatprep.subr.mxu0 0.0
    %1526 = vmatpush1.msra.mxu0 0.0
    %1527 = vmatprep.subr.mxu0 0.0
    %1528 = vmatpush1.msra.mxu0 0.0
    %1529 = vmatprep.subr.mxu0 0.0
    %1530 = vmatpush1.msra.mxu0 0.0
    %1531 = vmatprep.subr.mxu0 0.0
    %1532 = vmatpush1.msra.mxu0 0.0
    %1533 = vmatprep.subr.mxu0 0.0
    %1534 = vmatpush1.msra.mxu0 0.0
    %1535 = vmatprep.subr.mxu0 0.0
    %1536 = vmatpush1.msra.mxu0 0.0
    %1537 = vmatprep.subr.mxu0 0.0
    %1538 = vmatpush1.msra.mxu0 0.0
    %1539 = vmatprep.subr.mxu0 0.0
    %1540 = vmatpush1.msra.mxu0 0.0
    %1541 = vmatprep.subr.mxu0 0.0
    %1542 = vmatpush1.msra.mxu0 0.0
    %1543 = vmatprep.subr.mxu0 0.0
    %1544 = vmatpush1.msra.mxu0 0.0
    %1545 = vmatprep.subr.mxu0 0.0
    %1546 = vmatpush1.msra.mxu0 0.0
    %1547 = vmatprep.subr.mxu0 0.0
    %1548 = vmatpush1.msra.mxu0 0.0
    %1549 = vmatprep.subr.mxu0 0.0
    %1550 = vmatpush1.msra.mxu0 0.0
    %1551 = vmatprep.subr.mxu0 0.0
    %1552 = vmatpush1.msra.mxu0 0.0
    %1553 = vmatprep.subr.mxu0 0.0
    %1554 = vmatpush1.msra.mxu0 0.0
    %1555 = vmatprep.subr.mxu0 0.0
    %1556 = vmatpush1.msra.mxu0 0.0
    %1557 = vmatprep.subr.mxu0 0.0
    %1558 = vmatpush1.msra.mxu0 0.0
    %1559 = vmatprep.subr.mxu0 0.0
    %1560 = vmatpush1.msra.mxu0 0.0
    %1561 = vmatprep.subr.mxu0 0.0
    %1562 = vmatpush1.msra.mxu0 0.0
    %1563 = vmatprep.subr.mxu0 0.0
    %1564 = vmatpush1.msra.mxu0 0.0
    %1565 = vmatprep.subr.mxu0 0.0
    %1566 = vmatpush1.msra.mxu0 0.0
    %1567 = vmatprep.subr.mxu0 0.0
    %1568 = vmatpush1.msra.mxu0 0.0
    %1569 = vmatprep.subr.mxu0 0.0
    %1570 = vmatpush1.msra.mxu0 0.0
    %1571 = vmatprep.subr.mxu0 0.0
    %1572 = vmatpush1.msra.mxu0 0.0
    %1573 = vmatprep.subr.mxu0 0.0
    %1574 = vmatpush1.msra.mxu0 0.0
    %1575 = vmatprep.subr.mxu0 0.0
    %1576 = vmatpush1.msra.mxu0 0.0
    %1577 = vmatprep.subr.mxu0 0.0
    %1578 = vmatpush1.msra.mxu0 0.0
    %1579 = vmatprep.subr.mxu0 0.0
    %1580 = vmatpush1.msra.mxu0 0.0
    %1581 = vmatprep.mubr.f32.mxu0 0.0
    %v1582 = vand.u32 %v1166, 4294901760
    %1583 = vmatmul.mubr.f32.gmra.mrb[0].mxu0 %v1582
    %v1584 = vpop.f32.mrb[0].mxu0
    %v1585 = vadd.f32 %v1500, %v1584
    %v1586 = vpop.f32.mrb[0].mxu0
    %1587 = vmatprep.mubr.f32.mxu0 0.0
    %v1588 = vand.u32 %v1169, 4294901760
    %1589 = vmatmul.mubr.f32.gmra.mrb[0].mxu0 %v1588
    %v1590 = vpop.f32.mrb[0].mxu0
    %v1591 = vadd.f32 %v1508, %v1590
    %v1592 = vpop.f32.mrb[0].mxu0
    %1593 = vdwg.mxu0
    %1594 = vmatprep.subr.mxu0 0.0
    %v1595 = vand.u32 %v1160, 4294901760
    %1596 = vmatpush1.msra.mxu0 %v1595
    %1597 = vmatprep.subr.mxu0 0.0
    %v1598 = vand.u32 %v1162, 4294901760
    %1599 = vmatpush1.msra.mxu0 %v1598
    %1600 = vmatprep.subr.mxu0 0.0
    %1601 = vmatpush1.msra.mxu0 0.0
    %1602 = vmatprep.subr.mxu0 0.0
    %1603 = vmatpush1.msra.mxu0 0.0
    %1604 = vmatprep.subr.mxu0 0.0
    %1605 = vmatpush1.msra.mxu0 0.0
    %1606 = vmatprep.subr.mxu0 0.0
    %1607 = vmatpush1.msra.mxu0 0.0
    %1608 = vmatprep.subr.mxu0 0.0
    %1609 = vmatpush1.msra.mxu0 0.0
    %1610 = vmatprep.subr.mxu0 0.0
    %1611 = vmatpush1.msra.mxu0 0.0
    %1612 = vmatprep.subr.mxu0 0.0
    %1613 = vmatpush1.msra.mxu0 0.0
    %1614 = vmatprep.subr.mxu0 0.0
    %1615 = vmatpush1.msra.mxu0 0.0
    %1616 = vmatprep.subr.mxu0 0.0
    %1617 = vmatpush1.msra.mxu0 0.0
    %1618 = vmatprep.subr.mxu0 0.0
    %1619 = vmatpush1.msra.mxu0 0.0
    %1620 = vmatprep.subr.mxu0 0.0
    %1621 = vmatpush1.msra.mxu0 0.0
    %1622 = vmatprep.subr.mxu0 0.0
    %1623 = vmatpush1.msra.mxu0 0.0
    %1624 = vmatprep.subr.mxu0 0.0
    %1625 = vmatpush1.msra.mxu0 0.0
    %1626 = vmatprep.subr.mxu0 0.0
    %1627 = vmatpush1.msra.mxu0 0.0
    %1628 = vmatprep.subr.mxu0 0.0
    %1629 = vmatpush1.msra.mxu0 0.0
    %1630 = vmatprep.subr.mxu0 0.0
    %1631 = vmatpush1.msra.mxu0 0.0
    %1632 = vmatprep.subr.mxu0 0.0
    %1633 = vmatpush1.msra.mxu0 0.0
    %1634 = vmatprep.subr.mxu0 0.0
    %1635 = vmatpush1.msra.mxu0 0.0
    %1636 = vmatprep.subr.mxu0 0.0
    %1637 = vmatpush1.msra.mxu0 0.0
    %1638 = vmatprep.subr.mxu0 0.0
    %1639 = vmatpush1.msra.mxu0 0.0
    %1640 = vmatprep.subr.mxu0 0.0
    %1641 = vmatpush1.msra.mxu0 0.0
    %1642 = vmatprep.subr.mxu0 0.0
    %1643 = vmatpush1.msra.mxu0 0.0
    %1644 = vmatprep.subr.mxu0 0.0
    %1645 = vmatpush1.msra.mxu0 0.0
    %1646 = vmatprep.subr.mxu0 0.0
    %1647 = vmatpush1.msra.mxu0 0.0
    %1648 = vmatprep.subr.mxu0 0.0
    %1649 = vmatpush1.msra.mxu0 0.0
    %1650 = vmatprep.subr.mxu0 0.0
    %1651 = vmatpush1.msra.mxu0 0.0
    %1652 = vmatprep.subr.mxu0 0.0
    %1653 = vmatpush1.msra.mxu0 0.0
    %1654 = vmatprep.subr.mxu0 0.0
    %1655 = vmatpush1.msra.mxu0 0.0
    %1656 = vmatprep.subr.mxu0 0.0
    %1657 = vmatpush1.msra.mxu0 0.0
    %1658 = vmatprep.subr.mxu0 0.0
    %1659 = vmatpush1.msra.mxu0 0.0
    %1660 = vmatprep.mubr.f32.mxu0 0.0
    %v1661 = vand.u32 %v1166, 4294901760
    %1662 = vmatmul.mubr.f32.gmra.mrb[0].mxu0 %v1661
    %v1663 = vpop.f32.mrb[0].mxu0
    %v1664 = vadd.f32 %v1585, %v1663
    %v1665 = vpop.f32.mrb[0].mxu0
    %1666 = vmatprep.mubr.f32.mxu0 0.0
    %v1667 = vand.u32 %v1169, 4294901760
    %1668 = vmatmul.mubr.f32.gmra.mrb[0].mxu0 %v1667
    %v1669 = vpop.f32.mrb[0].mxu0
    %v1670 = vadd.f32 %v1591, %v1669
    %v1671 = vpop.f32.mrb[0].mxu0
    %1672 = vdwg.mxu0
    %1673 = vst.msk [vmem:[#allocation2] sm:$0xff] %vm618, %v1664
    %1674 = vst.msk [vmem:[#allocation2 + $0x8] sm:$0xff] %vm618, %v1670
    // Predicated region
    $region14: #{tpu_custom_call.1} parent=1 // pred_check
      _
    $region15: #{tpu_custom_call.1} parent=1 // pred_check_branch
      %1676 = sbr.rel (0) target = $region17
    $region16: #{tpu_custom_call.1} parent=1 // pred_region
      %s1678 = ssub.s32 256, 256
      %1679 = vsyncadd [#allocation3], %s1678
      %s1680 = sshll.u32 [#allocation2], 4
      %s1681 = int_to_ptr.vmem [resolvable:$true] %s1680
      %1686 = dma.vmem_to_hbm [thread:$0]  %s1681, 256, %s3, [#allocation3], 128, 128, 8
    $region17: #{tpu_custom_call.1} parent=1 // pred_fallthru
      _
    // Predicated region
    $region18: #{tpu_custom_call.1} parent=1 // pred_check
      _
    $region19: #{tpu_custom_call.1} parent=1 // pred_check_branch
      %1688 = sbr.rel (0) target = $region21
    $region20: #{tpu_custom_call.1} parent=1 // pred_region
      %1689 = dma.done [#allocation3], 256
    $region21: #{tpu_custom_call.1} parent=1 // pred_fallthru
      _
    %1690 = vsyncpa [#allocation3], 1

</llo_original>
